<compile_context>
chip_gen: v7x
topology: tpu7x:2x2x1
jax: 0.10.0
libtpu: 0.0.40
codegen_flags: <defaults>
</compile_context>

<pallas_src>
import math
from functools import partial

import numpy as np
import jax
import jax.numpy as jnp
from jax.experimental import pallas as pl
from jax.experimental.pallas import tpu as pltpu

_LANES = 128
_SUB = 8


def _sigmoid(z):
    # 1/(1+exp(-z)); exp rides the EUP slot.
    return 1.0 / (1.0 + jnp.exp(-z))


# ---------------------------------------------------------------- weight slab
def _pack_slab(pieces):
    """Pack small 2-D f32 params into one (rows, 128) slab.

    Each piece is zero-padded to 128 lanes and an 8-row (sublane) boundary so
    in-kernel carving uses aligned static slices. Returns (slab, layout) where
    layout is a hashable tuple of (name, (row_off, rows, cols))."""
    layout = []
    blocks = []
    off = 0
    for name, arr in pieces:
        a = np.asarray(arr, np.float32)
        r, c = a.shape
        assert c <= _LANES, f"{name}: width {c} > {_LANES}"
        rp = ((r + _SUB - 1) // _SUB) * _SUB
        blk = np.zeros((rp, _LANES), np.float32)
        blk[:r, :c] = a
        blocks.append(blk)
        layout.append((name, (off, r, c)))
        off += rp
    return jnp.asarray(np.concatenate(blocks, axis=0)), tuple(layout)


def _linear(key, fan_in, fan_out):
    k1, k2 = jax.random.split(key)
    bound = 1.0 / math.sqrt(fan_in)
    w = jax.random.uniform(k1, (fan_in, fan_out), jnp.float32, -bound, bound)
    b = jax.random.uniform(k2, (1, fan_out), jnp.float32, -bound, bound)
    return w, b


def init_params(key, n_features=64, dim=64):
    """Build all parameters and pack them into one DMA-able slab."""
    dim1, dim2, dim4, dim5, kh = 64, 100, 64, 12, 8
    keys = jax.random.split(key, 16)

    w11, b11 = _linear(keys[0], n_features, kh)     # nn1: Linear(F, 8)
    w12, b12 = _linear(keys[1], kh, dim)            #      Linear(8, 64)
    w21, b21 = _linear(keys[2], n_features, kh)     # nn2: Linear(F, 8)
    w22, b22 = _linear(keys[3], kh, dim2)           #      Linear(8, 100)

    w_p1 = jax.random.uniform(keys[4], (1, dim), jnp.float32,
                              -1.0 / math.sqrt(dim), 1.0 / math.sqrt(dim))
    w_p2 = jax.random.uniform(keys[5], (1, dim2), jnp.float32,
                              -1.0 / math.sqrt(dim2), 1.0 / math.sqrt(dim2))
    wn1 = (w_p1 / jnp.linalg.norm(w_p1)).T          # (dim, 1), 1/||w|| folded
    wn2 = (w_p2 / jnp.linalg.norm(w_p2)).T          # (dim2, 1)
    # Fold the pool score weight through the 2nd GIN linear so the score is
    # computed directly from the shared hidden h (parallel to the feature
    # matmul): sigmoid(x_c @ wn) == sigmoid(h @ (w2 @ wn) + b2 @ wn).
    ws1, bs1 = w12 @ wn1, b12 @ wn1                 # (8,1), (1,1)
    ws2, bs2 = w22 @ wn2, b22 @ wn2                 # (8,1), (1,1)

    wfc, bfc = _linear(keys[6], (dim1 + dim2) * 2, dim4)
    # fc1 weight split over the [max1 | mean1 | max2 | mean2] feature blocks
    wf1 = wfc[0:dim1]
    wf2 = wfc[dim1:2 * dim1]
    wf3 = wfc[2 * dim1:2 * dim1 + dim2]
    wf4 = wfc[2 * dim1 + dim2:]

    wh1s, bh1s, wh2_blocks, bh2s = [], [], [], []
    for h in range(3):
        w_a, b_a = _linear(keys[7 + 2 * h], dim4, dim5)
        w_b, b_b = _linear(keys[8 + 2 * h], dim5, 1)
        wh1s.append(np.asarray(w_a)); bh1s.append(np.asarray(b_a))
        wh2_blocks.append(np.asarray(w_b)); bh2s.append(np.asarray(b_b))
    wh1 = np.concatenate(wh1s, axis=1)              # (64, 36)
    bh1 = np.concatenate(bh1s, axis=1)              # (1, 36)
    wh2 = np.zeros((3 * dim5, 3), np.float32)       # block-diagonal (36, 3)
    for h in range(3):
        wh2[h * dim5:(h + 1) * dim5, h:h + 1] = wh2_blocks[h]
    bh2 = np.concatenate(bh2s, axis=1)              # (1, 3)

    pieces = [("w11", w11), ("b11", b11), ("w12", w12), ("b12", b12),
              ("ws1", ws1), ("bs1", bs1),
              ("w21", w21), ("b21", b21), ("w22", w22), ("b22", b22),
              ("ws2", ws2), ("bs2", bs2),
              ("wf1", wf1), ("wf2", wf2), ("wf3", wf3), ("wf4", wf4),
              ("bf", bfc),
              ("wh1", wh1), ("bh1", bh1), ("wh2", wh2), ("bh2", bh2)]
    return _pack_slab(pieces)


# ---------------------------------------------------------------- fused kernel
def _build_kernel(layout, eps1, eps2, k1, k2, B, npg, N):
    lay = dict(layout)

    def kernel(x_ref, adj_ref, struct_ref, w_ref, o_ref):
        def W(name):
            off, r, c = lay[name]                    # static python ints
            return w_ref[pl.ds(off, r), pl.ds(0, c)]  # free static carve

        x = x_ref[...]
        adj = adj_ref[...]
        same = struct_ref[pl.ds(0, N), :]            # (N,N) same-graph mask
        same_low = struct_ref[pl.ds(N, N), :]        # same * (col < row)
        ones_col = jnp.ones((N, 1), jnp.float32)

        def gin_hidden(xin, eps, w1, b1):
            # GINConv first half: ReLU(Linear((1+eps)*x + sum_{j->i} x_j)).
            agg = jnp.dot(adj, xin, preferred_element_type=jnp.float32)
            pre = (1.0 + eps) * xin + agg
            return jnp.maximum(
                jnp.dot(pre, w1, preferred_element_type=jnp.float32) + b1, 0.0)

        def topk_select(score, prev_sel, k):
            # Dense per-graph top-k: node i survives iff fewer than k
            # same-graph, still-alive nodes beat it (ties -> smaller index).
            s_eff = score if prev_sel is None else jnp.where(prev_sel > 0.5,
                                                             score, -1.0)
            si = jnp.broadcast_to(s_eff, (N, N))     # (i, j) -> s_i
            # (i, j) -> s_j via a K=1 NT outer product (transpose folded into
            # the MXU operand) — replaces the old eye-diag matmul trick.
            sj = jax.lax.dot_general(ones_col, s_eff, (((1,), (1,)), ((), ())),
                                     preferred_element_type=jnp.float32)
            gt = (sj > si).astype(jnp.float32)
            eq = (sj == si).astype(jnp.float32)
            # rank stays on the XLU (lane reduce), off the MXU critical path.
            rank = jnp.sum(same * gt + same_low * eq, axis=1, keepdims=True)
            sel = (rank < float(k)).astype(jnp.float32)
            return sel if prev_sel is None else sel * prev_sel

        def readout(xp, sel, k):
            # [global_max_pool | global_mean_pool] per graph. Graph b owns the
            # contiguous rows [b*npg, (b+1)*npg); dropped rows of xp are zero
            # and exactly k nodes survive per graph, so mean = sum * 1/k.
            F = xp.shape[1]
            brow = jax.lax.broadcasted_iota(jnp.int32, (B, 1), 0)
            mx = jnp.zeros((B, F), jnp.float32)
            mn = jnp.zeros((B, F), jnp.float32)
            for b in range(B):                       # B tiny & static
                lo = b * npg
                xg = xp[lo:lo + npg, :]
                sg = sel[lo:lo + npg, :]
                row_m = jnp.max(jnp.where(sg > 0.0, xg, -1e30),
                                axis=0, keepdims=True)          # (1, F)
                row_s = jnp.sum(xg, axis=0, keepdims=True) * (1.0 / float(k))
                hit = (brow == b).astype(jnp.float32)
                mx = mx + hit * row_m
                mn = mn + hit * row_s
            return mx, mn

        # ---- stage 1: conv1 -> pool1 (score + select) -> readout ----
        h1 = gin_hidden(x, eps1, W("w11"), W("b11"))
        x1c = jnp.dot(h1, W("w12"), preferred_element_type=jnp.float32) + W("b12")
        s1 = _sigmoid(jnp.dot(h1, W("ws1"),
                              preferred_element_type=jnp.float32) + W("bs1"))
        sel1 = topk_select(s1, None, k1)
        xp1 = x1c * s1 * sel1                        # dropped rows -> 0
        mx1, mn1 = readout(xp1, sel1, k1)

        # ---- stage 2: conv2 -> pool2 -> readout ----
        # adj needs no masking: dropped nodes' xp1 rows are zero so they add
        # nothing to the neighbor sum; their own conv2 rows are masked out of
        # the pool2 rank (via sel1) and of the readout (via sel2).
        h2 = gin_hidden(xp1, eps2, W("w21"), W("b21"))
        x2c = jnp.dot(h2, W("w22"), preferred_element_type=jnp.float32) + W("b22")
        s2 = _sigmoid(jnp.dot(h2, W("ws2"),
                              preferred_element_type=jnp.float32) + W("bs2"))
        sel2 = topk_select(s2, sel1, k2)
        xp2 = x2c * s2 * sel2
        mx2, mn2 = readout(xp2, sel2, k2)

        # ---- fc1 + heads (Dropout(0.2) is eval-mode identity) ----
        fc = (jnp.dot(mx1, W("wf1"), preferred_element_type=jnp.float32)
              + jnp.dot(mn1, W("wf2"), preferred_element_type=jnp.float32)
              + jnp.dot(mx2, W("wf3"), preferred_element_type=jnp.float32)
              + jnp.dot(mn2, W("wf4"), preferred_element_type=jnp.float32)
              + W("bf"))
        fc = jnp.maximum(fc, 0.0)
        # TODO(synk): Dropout(0.2) inside each head is eval-mode (= identity).
        h = jnp.maximum(jnp.dot(fc, W("wh1"),
                                preferred_element_type=jnp.float32) + W("bh1"), 0.0)
        out = jnp.dot(h, W("wh2"),
                      preferred_element_type=jnp.float32) + W("bh2")   # (B, 3)
        head_col = jax.lax.broadcasted_iota(jnp.int32, (B, 3), 1)
        o_ref[...] = jnp.where(head_col == 0, _sigmoid(out), out)

    return kernel


# ---------------------------------------------------------------- wrapper
@partial(jax.jit,
         static_argnames=("layout", "B", "nodes_per_graph", "dim", "dim2"))
def gin_att_net_forward(slab, x, adj, batch, pos, *, layout, B,
                        nodes_per_graph, dim=64, dim2=100):
    # batch is assumed to be repeat(arange(B), nodes_per_graph) (contiguous,
    # equal-sized graphs); the structural masks are built from that static
    # layout at trace time.  pos[perm] in the reference is never used.
    del batch, pos
    N = B * nodes_per_graph
    ratio = 0.5
    k1 = int(math.ceil(ratio * nodes_per_graph))     # kept per graph, pool1
    k2 = int(math.ceil(ratio * k1))                  # kept per graph, pool2
    # GINConv(nn1, dim)/GINConv(nn2, dim2): dim/dim2 are the positional eps
    # argument in the reference module — reproduced faithfully.
    eps1, eps2 = float(dim), float(dim2)

    # Trace-time structural constants (numpy -> baked into one tiny DMA).
    gidx = np.repeat(np.arange(B), nodes_per_graph)
    same_np = (gidx[:, None] == gidx[None, :]).astype(np.float32)      # (N,N)
    low_np = (np.arange(N)[None, :] < np.arange(N)[:, None]).astype(np.float32)
    struct = jnp.asarray(np.concatenate([same_np, same_np * low_np], axis=0))

    kernel = _build_kernel(layout, eps1, eps2, k1, k2, B, nodes_per_graph, N)

    def full_spec(shape):
        nd = len(shape)
        return pl.BlockSpec(shape, lambda i, _nd=nd: (0,) * _nd)

    # Advisory cost estimate so XLA schedules the custom call tightly.
    F = x.shape[1]
    kh = 8
    flops = int(2 * N * N * F + 2 * N * F * kh + 2 * N * kh * (dim + 1)
                + 2 * N * N * dim + 2 * N * dim * kh + 2 * N * kh * (dim2 + 1)
                + 16 * N * N
                + 2 * B * (2 * dim + 2 * dim2) * 64
                + 2 * B * 64 * 36 + 2 * B * 36 * 3)
    cost = pl.CostEstimate(
        flops=flops, transcendentals=2 * N + B,
        bytes_accessed=int(4 * (x.size + adj.size + struct.size
                                + slab.size + B * 3)))

    # grid=(1,): at B=2 a graph-parallel grid would only add per-step overhead;
    # switch to grid=(B,) with dimension_semantics=("parallel",) when B grows
    # (uses both v7x TensorCores).
    out = pl.pallas_call(
        kernel,
        out_shape=jax.ShapeDtypeStruct((B, 3), jnp.float32),
        grid=(1,),
        in_specs=[full_spec(x.shape), full_spec(adj.shape),
                  full_spec(struct.shape), full_spec(slab.shape)],
        out_specs=full_spec((B, 3)),
        compiler_params=pltpu.CompilerParams(dimension_semantics=("arbitrary",)),
        cost_estimate=cost,
    )(x, adj, struct, slab)
    return out[:, 0:1], out[:, 1:2], out[:, 2:3]


# ---------------------------------------------------------------- demo / harness
if __name__ == "__main__":
    key = jax.random.PRNGKey(0)
    n_features = 64          # must equal dim (= dim1) for the reference forward
    dim = 64
    B = 2                    # graphs in the batch
    nodes_per_graph = 8
    N = B * nodes_per_graph
    edges_per_graph = 12

    kp, kx, kpos, ke1, ke2 = jax.random.split(key, 5)
    slab, layout = init_params(kp, n_features=n_features, dim=dim)

    x = jax.random.normal(kx, (N, n_features), jnp.float32)
    pos = jax.random.normal(kpos, (N, 3), jnp.float32)
    batch = jnp.repeat(jnp.arange(B), nodes_per_graph)

    # random directed edges within each graph -> dense adjacency A[dst, src]
    src = jax.random.randint(ke1, (B, edges_per_graph), 0, nodes_per_graph)
    dst = jax.random.randint(ke2, (B, edges_per_graph), 0, nodes_per_graph)
    offsets = (jnp.arange(B) * nodes_per_graph)[:, None]
    src = (src + offsets).reshape(-1)
    dst = (dst + offsets).reshape(-1)
    adj = jnp.zeros((N, N), jnp.float32).at[dst, src].add(1.0)

    out1, out2, out3 = gin_att_net_forward(slab, x, adj, batch, pos,
                                           layout=layout, B=B,
                                           nodes_per_graph=nodes_per_graph,
                                           dim=dim)
    jax.block_until_ready((out1, out2, out3))
    assert out1.shape == (B, 1) and out2.shape == (B, 1) and out3.shape == (B, 1)
    print("KERNEL_OK")
</pallas_src>

<mosaic_0001>
module attributes {stable_mosaic.version = 11 : i64} {
  func.func @kernel(%arg0: i32, %arg1: memref<16x64xf32, #tpu.memory_space<vmem>>, %arg2: memref<16x16xf32, #tpu.memory_space<vmem>>, %arg3: memref<32x16xf32, #tpu.memory_space<vmem>>, %arg4: memref<672x128xf32, #tpu.memory_space<vmem>>, %arg5: memref<2x3xf32, #tpu.memory_space<vmem>>) attributes {dimension_semantics = [#tpu.dimension_semantics<arbitrary>], iteration_bounds = array<i64: 1>, scalar_prefetch = 0 : i64, scratch_operands = 0 : i64, tpu.core_type = #tpu.core_type<tc>, window_params = [{pipeline_mode = #tpu.pipeline_mode<synchronous>, transform_indices = @transform_0, window_bounds = array<i64: 16, 64>}, {pipeline_mode = #tpu.pipeline_mode<synchronous>, transform_indices = @transform_1, window_bounds = array<i64: 16, 16>}, {pipeline_mode = #tpu.pipeline_mode<synchronous>, transform_indices = @transform_2, window_bounds = array<i64: 32, 16>}, {pipeline_mode = #tpu.pipeline_mode<synchronous>, transform_indices = @transform_3, window_bounds = array<i64: 672, 128>}, {pipeline_mode = #tpu.pipeline_mode<synchronous>, transform_indices = @transform_4, window_bounds = array<i64: 2, 3>}]} {
    %c0 = arith.constant 0 : index
    %c0_0 = arith.constant 0 : index
    %0 = vector.load %arg1[%c0, %c0_0] : memref<16x64xf32, #tpu.memory_space<vmem>>, vector<16x64xf32>
    %c0_1 = arith.constant 0 : index
    %c0_2 = arith.constant 0 : index
    %1 = vector.load %arg2[%c0_1, %c0_2] : memref<16x16xf32, #tpu.memory_space<vmem>>, vector<16x16xf32>
    %c0_3 = arith.constant 0 : index
    %c0_4 = arith.constant 0 : index
    %2 = vector.load %arg3[%c0_3, %c0_4] : memref<32x16xf32, #tpu.memory_space<vmem>>, vector<16x16xf32>
    %c16 = arith.constant 16 : index
    %c0_5 = arith.constant 0 : index
    %3 = vector.load %arg3[%c16, %c0_5] : memref<32x16xf32, #tpu.memory_space<vmem>>, vector<16x16xf32>
    %cst = arith.constant 1.000000e+00 : f32
    %4 = vector.broadcast %cst : f32 to vector<16x1xf32>
    %c0_6 = arith.constant 0 : index
    %c0_7 = arith.constant 0 : index
    %5 = vector.load %arg4[%c0_6, %c0_7] : memref<672x128xf32, #tpu.memory_space<vmem>>, vector<64x8xf32>
    %c64 = arith.constant 64 : index
    %c0_8 = arith.constant 0 : index
    %6 = vector.load %arg4[%c64, %c0_8] : memref<672x128xf32, #tpu.memory_space<vmem>>, vector<1x8xf32>
    %cst_9 = arith.constant dense<0.000000e+00> : vector<16x64xf32>
    %7 = tpu.matmul %1, %0, %cst_9 {dimension_numbers = #tpu.dot_dimension_numbers<[1], [0], [0], [1], [0, 0, 1, 1], [], []>} : vector<16x16xf32>, vector<16x64xf32>, vector<16x64xf32> -> vector<16x64xf32>
    %cst_10 = arith.constant 6.500000e+01 : f32
    %8 = vector.broadcast %cst_10 : f32 to vector<16x64xf32>
    %9 = arith.mulf %8, %0 : vector<16x64xf32>
    %10 = arith.addf %9, %7 : vector<16x64xf32>
    %cst_11 = arith.constant dense<0.000000e+00> : vector<16x8xf32>
    %11 = tpu.matmul %10, %5, %cst_11 {dimension_numbers = #tpu.dot_dimension_numbers<[1], [0], [0], [1], [0, 0, 1, 1], [], []>} : vector<16x64xf32>, vector<64x8xf32>, vector<16x8xf32> -> vector<16x8xf32>
    %12 = vector.broadcast %6 : vector<1x8xf32> to vector<16x8xf32>
    %13 = arith.addf %11, %12 : vector<16x8xf32>
    %cst_12 = arith.constant 0.000000e+00 : f32
    %14 = vector.broadcast %cst_12 : f32 to vector<16x8xf32>
    %15 = arith.maximumf %13, %14 : vector<16x8xf32>
    %c72 = arith.constant 72 : index
    %c0_13 = arith.constant 0 : index
    %16 = vector.load %arg4[%c72, %c0_13] : memref<672x128xf32, #tpu.memory_space<vmem>>, vector<8x64xf32>
    %cst_14 = arith.constant dense<0.000000e+00> : vector<16x64xf32>
    %17 = tpu.matmul %15, %16, %cst_14 {dimension_numbers = #tpu.dot_dimension_numbers<[1], [0], [0], [1], [0, 0, 1, 1], [], []>} : vector<16x8xf32>, vector<8x64xf32>, vector<16x64xf32> -> vector<16x64xf32>
    %c80 = arith.constant 80 : index
    %c0_15 = arith.constant 0 : index
    %18 = vector.load %arg4[%c80, %c0_15] : memref<672x128xf32, #tpu.memory_space<vmem>>, vector<1x64xf32>
    %19 = vector.broadcast %18 : vector<1x64xf32> to vector<16x64xf32>
    %20 = arith.addf %17, %19 : vector<16x64xf32>
    %c88 = arith.constant 88 : index
    %c0_16 = arith.constant 0 : index
    %21 = vector.load %arg4[%c88, %c0_16] : memref<672x128xf32, #tpu.memory_space<vmem>>, vector<8x1xf32>
    %cst_17 = arith.constant dense<0.000000e+00> : vector<16x1xf32>
    %22 = tpu.matmul %15, %21, %cst_17 {dimension_numbers = #tpu.dot_dimension_numbers<[1], [0], [0], [1], [0, 0, 1, 1], [], []>} : vector<16x8xf32>, vector<8x1xf32>, vector<16x1xf32> -> vector<16x1xf32>
    %c96 = arith.constant 96 : index
    %c0_18 = arith.constant 0 : index
    %23 = vector.load %arg4[%c96, %c0_18] : memref<672x128xf32, #tpu.memory_space<vmem>>, vector<1x1xf32>
    %24 = vector.broadcast %23 : vector<1x1xf32> to vector<16x1xf32>
    %25 = arith.addf %22, %24 : vector<16x1xf32>
    %cst_19 = arith.constant 0.000000e+00 : f32
    %26 = vector.broadcast %cst_19 : f32 to vector<16x1xf32>
    %27 = arith.subf %26, %25 : vector<16x1xf32>
    %28 = math.exp %27 : vector<16x1xf32>
    %cst_20 = arith.constant 1.000000e+00 : f32
    %29 = vector.broadcast %cst_20 : f32 to vector<16x1xf32>
    %30 = arith.addf %29, %28 : vector<16x1xf32>
    %cst_21 = arith.constant 1.000000e+00 : f32
    %31 = vector.broadcast %cst_21 : f32 to vector<16x1xf32>
    %32 = arith.divf %31, %30 : vector<16x1xf32>
    %33 = vector.shape_cast %32 : vector<16x1xf32> to vector<16x1xf32>
    %34 = vector.broadcast %33 : vector<16x1xf32> to vector<16x16xf32>
    %cst_22 = arith.constant dense<0.000000e+00> : vector<16x16xf32>
    %35 = tpu.matmul %4, %32, %cst_22 {dimension_numbers = #tpu.dot_dimension_numbers<[1], [1], [0], [0], [0, 0, 1, 0], [], []>} : vector<16x1xf32>, vector<16x1xf32>, vector<16x16xf32> -> vector<16x16xf32>
    %36 = arith.cmpf ogt, %35, %34 : vector<16x16xf32>
    %37 = arith.extui %36 : vector<16x16xi1> to vector<16x16xi32>
    %38 = arith.sitofp %37 : vector<16x16xi32> to vector<16x16xf32>
    %39 = arith.cmpf oeq, %35, %34 : vector<16x16xf32>
    %40 = arith.extui %39 : vector<16x16xi1> to vector<16x16xi32>
    %41 = arith.sitofp %40 : vector<16x16xi32> to vector<16x16xf32>
    %42 = arith.mulf %2, %38 : vector<16x16xf32>
    %43 = arith.mulf %3, %41 : vector<16x16xf32>
    %44 = arith.addf %42, %43 : vector<16x16xf32>
    %cst_23 = arith.constant dense<0.000000e+00> : vector<16xf32>
    %45 = vector.multi_reduction <add>, %44, %cst_23 [1] : vector<16x16xf32> to vector<16xf32>
    %46 = vector.shape_cast %45 : vector<16xf32> to vector<16x1xf32>
    %cst_24 = arith.constant 4.000000e+00 : f32
    %47 = vector.broadcast %cst_24 : f32 to vector<16x1xf32>
    %48 = arith.cmpf olt, %46, %47 : vector<16x1xf32>
    %49 = arith.extui %48 : vector<16x1xi1> to vector<16x1xi32>
    %50 = arith.sitofp %49 : vector<16x1xi32> to vector<16x1xf32>
    %51 = vector.broadcast %32 : vector<16x1xf32> to vector<16x64xf32>
    %52 = arith.mulf %20, %51 : vector<16x64xf32>
    %53 = vector.broadcast %50 : vector<16x1xf32> to vector<16x64xf32>
    %54 = arith.mulf %52, %53 : vector<16x64xf32>
    %55 = tpu.iota {dimensions = array<i32: 0>} : vector<2x1xi32>
    %cst_25 = arith.constant 0.000000e+00 : f32
    %56 = vector.broadcast %cst_25 : f32 to vector<2x64xf32>
    %cst_26 = arith.constant 0.000000e+00 : f32
    %57 = vector.broadcast %cst_26 : f32 to vector<2x64xf32>
    %58 = vector.extract_strided_slice %54 {offsets = [0, 0], sizes = [8, 64], strides = [1, 1]} : vector<16x64xf32> to vector<8x64xf32>
    %59 = vector.extract_strided_slice %50 {offsets = [0, 0], sizes = [8, 1], strides = [1, 1]} : vector<16x1xf32> to vector<8x1xf32>
    %cst_27 = arith.constant 0.000000e+00 : f32
    %60 = vector.broadcast %cst_27 : f32 to vector<8x1xf32>
    %61 = arith.cmpf ogt, %59, %60 : vector<8x1xf32>
    %cst_28 = arith.constant -1.000000e+30 : f32
    %62 = vector.shape_cast %61 : vector<8x1xi1> to vector<8x1xi1>
    %63 = vector.broadcast %62 : vector<8x1xi1> to vector<8x64xi1>
    %64 = vector.broadcast %cst_28 : f32 to vector<8x64xf32>
    %65 = arith.select %63, %58, %64 : vector<8x64xi1>, vector<8x64xf32>
    %cst_29 = arith.constant dense<0xFF800000> : vector<64xf32>
    %66 = vector.multi_reduction <maximumf>, %65, %cst_29 [0] : vector<8x64xf32> to vector<64xf32>
    %67 = vector.shape_cast %66 : vector<64xf32> to vector<1x64xf32>
    %cst_30 = arith.constant dense<0.000000e+00> : vector<64xf32>
    %68 = vector.multi_reduction <add>, %58, %cst_30 [0] : vector<8x64xf32> to vector<64xf32>
    %69 = vector.shape_cast %68 : vector<64xf32> to vector<1x64xf32>
    %cst_31 = arith.constant 2.500000e-01 : f32
    %70 = vector.broadcast %cst_31 : f32 to vector<1x64xf32>
    %71 = arith.mulf %69, %70 : vector<1x64xf32>
    %c0_i32 = arith.constant 0 : i32
    %72 = vector.broadcast %c0_i32 : i32 to vector<2x1xi32>
    %73 = arith.cmpi eq, %55, %72 : vector<2x1xi32>
    %74 = arith.extui %73 : vector<2x1xi1> to vector<2x1xi32>
    %75 = arith.sitofp %74 : vector<2x1xi32> to vector<2x1xf32>
    %76 = vector.broadcast %75 : vector<2x1xf32> to vector<2x64xf32>
    %77 = vector.broadcast %67 : vector<1x64xf32> to vector<2x64xf32>
    %78 = arith.mulf %76, %77 : vector<2x64xf32>
    %79 = arith.addf %56, %78 : vector<2x64xf32>
    %80 = vector.broadcast %75 : vector<2x1xf32> to vector<2x64xf32>
    %81 = vector.broadcast %71 : vector<1x64xf32> to vector<2x64xf32>
    %82 = arith.mulf %80, %81 : vector<2x64xf32>
    %83 = arith.addf %57, %82 : vector<2x64xf32>
    %84 = vector.extract_strided_slice %54 {offsets = [8, 0], sizes = [8, 64], strides = [1, 1]} : vector<16x64xf32> to vector<8x64xf32>
    %85 = vector.extract_strided_slice %50 {offsets = [8, 0], sizes = [8, 1], strides = [1, 1]} : vector<16x1xf32> to vector<8x1xf32>
    %cst_32 = arith.constant 0.000000e+00 : f32
    %86 = vector.broadcast %cst_32 : f32 to vector<8x1xf32>
    %87 = arith.cmpf ogt, %85, %86 : vector<8x1xf32>
    %cst_33 = arith.constant -1.000000e+30 : f32
    %88 = vector.shape_cast %87 : vector<8x1xi1> to vector<8x1xi1>
    %89 = vector.broadcast %88 : vector<8x1xi1> to vector<8x64xi1>
    %90 = vector.broadcast %cst_33 : f32 to vector<8x64xf32>
    %91 = arith.select %89, %84, %90 : vector<8x64xi1>, vector<8x64xf32>
    %cst_34 = arith.constant dense<0xFF800000> : vector<64xf32>
    %92 = vector.multi_reduction <maximumf>, %91, %cst_34 [0] : vector<8x64xf32> to vector<64xf32>
    %93 = vector.shape_cast %92 : vector<64xf32> to vector<1x64xf32>
    %cst_35 = arith.constant dense<0.000000e+00> : vector<64xf32>
    %94 = vector.multi_reduction <add>, %84, %cst_35 [0] : vector<8x64xf32> to vector<64xf32>
    %95 = vector.shape_cast %94 : vector<64xf32> to vector<1x64xf32>
    %cst_36 = arith.constant 2.500000e-01 : f32
    %96 = vector.broadcast %cst_36 : f32 to vector<1x64xf32>
    %97 = arith.mulf %95, %96 : vector<1x64xf32>
    %c1_i32 = arith.constant 1 : i32
    %98 = vector.broadcast %c1_i32 : i32 to vector<2x1xi32>
    %99 = arith.cmpi eq, %55, %98 : vector<2x1xi32>
    %100 = arith.extui %99 : vector<2x1xi1> to vector<2x1xi32>
    %101 = arith.sitofp %100 : vector<2x1xi32> to vector<2x1xf32>
    %102 = vector.broadcast %101 : vector<2x1xf32> to vector<2x64xf32>
    %103 = vector.broadcast %93 : vector<1x64xf32> to vector<2x64xf32>
    %104 = arith.mulf %102, %103 : vector<2x64xf32>
    %105 = arith.addf %79, %104 : vector<2x64xf32>
    %106 = vector.broadcast %101 : vector<2x1xf32> to vector<2x64xf32>
    %107 = vector.broadcast %97 : vector<1x64xf32> to vector<2x64xf32>
    %108 = arith.mulf %106, %107 : vector<2x64xf32>
    %109 = arith.addf %83, %108 : vector<2x64xf32>
    %c104 = arith.constant 104 : index
    %c0_37 = arith.constant 0 : index
    %110 = vector.load %arg4[%c104, %c0_37] : memref<672x128xf32, #tpu.memory_space<vmem>>, vector<64x8xf32>
    %c168 = arith.constant 168 : index
    %c0_38 = arith.constant 0 : index
    %111 = vector.load %arg4[%c168, %c0_38] : memref<672x128xf32, #tpu.memory_space<vmem>>, vector<1x8xf32>
    %cst_39 = arith.constant dense<0.000000e+00> : vector<16x64xf32>
    %112 = tpu.matmul %1, %54, %cst_39 {dimension_numbers = #tpu.dot_dimension_numbers<[1], [0], [0], [1], [0, 0, 1, 1], [], []>} : vector<16x16xf32>, vector<16x64xf32>, vector<16x64xf32> -> vector<16x64xf32>
    %cst_40 = arith.constant 1.010000e+02 : f32
    %113 = vector.broadcast %cst_40 : f32 to vector<16x64xf32>
    %114 = arith.mulf %113, %54 : vector<16x64xf32>
    %115 = arith.addf %114, %112 : vector<16x64xf32>
    %cst_41 = arith.constant dense<0.000000e+00> : vector<16x8xf32>
    %116 = tpu.matmul %115, %110, %cst_41 {dimension_numbers = #tpu.dot_dimension_numbers<[1], [0], [0], [1], [0, 0, 1, 1], [], []>} : vector<16x64xf32>, vector<64x8xf32>, vector<16x8xf32> -> vector<16x8xf32>
    %117 = vector.broadcast %111 : vector<1x8xf32> to vector<16x8xf32>
    %118 = arith.addf %116, %117 : vector<16x8xf32>
    %cst_42 = arith.constant 0.000000e+00 : f32
    %119 = vector.broadcast %cst_42 : f32 to vector<16x8xf32>
    %120 = arith.maximumf %118, %119 : vector<16x8xf32>
    %c176 = arith.constant 176 : index
    %c0_43 = arith.constant 0 : index
    %121 = vector.load %arg4[%c176, %c0_43] : memref<672x128xf32, #tpu.memory_space<vmem>>, vector<8x100xf32>
    %cst_44 = arith.constant dense<0.000000e+00> : vector<16x100xf32>
    %122 = tpu.matmul %120, %121, %cst_44 {dimension_numbers = #tpu.dot_dimension_numbers<[1], [0], [0], [1], [0, 0, 1, 1], [], []>} : vector<16x8xf32>, vector<8x100xf32>, vector<16x100xf32> -> vector<16x100xf32>
    %c184 = arith.constant 184 : index
    %c0_45 = arith.constant 0 : index
    %123 = vector.load %arg4[%c184, %c0_45] : memref<672x128xf32, #tpu.memory_space<vmem>>, vector<1x100xf32>
    %124 = vector.broadcast %123 : vector<1x100xf32> to vector<16x100xf32>
    %125 = arith.addf %122, %124 : vector<16x100xf32>
    %c192 = arith.constant 192 : index
    %c0_46 = arith.constant 0 : index
    %126 = vector.load %arg4[%c192, %c0_46] : memref<672x128xf32, #tpu.memory_space<vmem>>, vector<8x1xf32>
    %cst_47 = arith.constant dense<0.000000e+00> : vector<16x1xf32>
    %127 = tpu.matmul %120, %126, %cst_47 {dimension_numbers = #tpu.dot_dimension_numbers<[1], [0], [0], [1], [0, 0, 1, 1], [], []>} : vector<16x8xf32>, vector<8x1xf32>, vector<16x1xf32> -> vector<16x1xf32>
    %c200 = arith.constant 200 : index
    %c0_48 = arith.constant 0 : index
    %128 = vector.load %arg4[%c200, %c0_48] : memref<672x128xf32, #tpu.memory_space<vmem>>, vector<1x1xf32>
    %129 = vector.broadcast %128 : vector<1x1xf32> to vector<16x1xf32>
    %130 = arith.addf %127, %129 : vector<16x1xf32>
    %cst_49 = arith.constant 0.000000e+00 : f32
    %131 = vector.broadcast %cst_49 : f32 to vector<16x1xf32>
    %132 = arith.subf %131, %130 : vector<16x1xf32>
    %133 = math.exp %132 : vector<16x1xf32>
    %cst_50 = arith.constant 1.000000e+00 : f32
    %134 = vector.broadcast %cst_50 : f32 to vector<16x1xf32>
    %135 = arith.addf %134, %133 : vector<16x1xf32>
    %cst_51 = arith.constant 1.000000e+00 : f32
    %136 = vector.broadcast %cst_51 : f32 to vector<16x1xf32>
    %137 = arith.divf %136, %135 : vector<16x1xf32>
    %cst_52 = arith.constant 5.000000e-01 : f32
    %138 = vector.broadcast %cst_52 : f32 to vector<16x1xf32>
    %139 = arith.cmpf ogt, %50, %138 : vector<16x1xf32>
    %cst_53 = arith.constant -1.000000e+00 : f32
    %140 = vector.broadcast %cst_53 : f32 to vector<16x1xf32>
    %141 = arith.select %139, %137, %140 : vector<16x1xi1>, vector<16x1xf32>
    %142 = vector.shape_cast %141 : vector<16x1xf32> to vector<16x1xf32>
    %143 = vector.broadcast %142 : vector<16x1xf32> to vector<16x16xf32>
    %cst_54 = arith.constant dense<0.000000e+00> : vector<16x16xf32>
    %144 = tpu.matmul %4, %141, %cst_54 {dimension_numbers = #tpu.dot_dimension_numbers<[1], [1], [0], [0], [0, 0, 1, 0], [], []>} : vector<16x1xf32>, vector<16x1xf32>, vector<16x16xf32> -> vector<16x16xf32>
    %145 = arith.cmpf ogt, %144, %143 : vector<16x16xf32>
    %146 = arith.extui %145 : vector<16x16xi1> to vector<16x16xi32>
    %147 = arith.sitofp %146 : vector<16x16xi32> to vector<16x16xf32>
    %148 = arith.cmpf oeq, %144, %143 : vector<16x16xf32>
    %149 = arith.extui %148 : vector<16x16xi1> to vector<16x16xi32>
    %150 = arith.sitofp %149 : vector<16x16xi32> to vector<16x16xf32>
    %151 = arith.mulf %2, %147 : vector<16x16xf32>
    %152 = arith.mulf %3, %150 : vector<16x16xf32>
    %153 = arith.addf %151, %152 : vector<16x16xf32>
    %cst_55 = arith.constant dense<0.000000e+00> : vector<16xf32>
    %154 = vector.multi_reduction <add>, %153, %cst_55 [1] : vector<16x16xf32> to vector<16xf32>
    %155 = vector.shape_cast %154 : vector<16xf32> to vector<16x1xf32>
    %cst_56 = arith.constant 2.000000e+00 : f32
    %156 = vector.broadcast %cst_56 : f32 to vector<16x1xf32>
    %157 = arith.cmpf olt, %155, %156 : vector<16x1xf32>
    %158 = arith.extui %157 : vector<16x1xi1> to vector<16x1xi32>
    %159 = arith.sitofp %158 : vector<16x1xi32> to vector<16x1xf32>
    %160 = arith.mulf %159, %50 : vector<16x1xf32>
    %161 = vector.broadcast %137 : vector<16x1xf32> to vector<16x100xf32>
    %162 = arith.mulf %125, %161 : vector<16x100xf32>
    %163 = vector.broadcast %160 : vector<16x1xf32> to vector<16x100xf32>
    %164 = arith.mulf %162, %163 : vector<16x100xf32>
    %165 = tpu.iota {dimensions = array<i32: 0>} : vector<2x1xi32>
    %cst_57 = arith.constant 0.000000e+00 : f32
    %166 = vector.broadcast %cst_57 : f32 to vector<2x100xf32>
    %cst_58 = arith.constant 0.000000e+00 : f32
    %167 = vector.broadcast %cst_58 : f32 to vector<2x100xf32>
    %168 = vector.extract_strided_slice %164 {offsets = [0, 0], sizes = [8, 100], strides = [1, 1]} : vector<16x100xf32> to vector<8x100xf32>
    %169 = vector.extract_strided_slice %160 {offsets = [0, 0], sizes = [8, 1], strides = [1, 1]} : vector<16x1xf32> to vector<8x1xf32>
    %cst_59 = arith.constant 0.000000e+00 : f32
    %170 = vector.broadcast %cst_59 : f32 to vector<8x1xf32>
    %171 = arith.cmpf ogt, %169, %170 : vector<8x1xf32>
    %cst_60 = arith.constant -1.000000e+30 : f32
    %172 = vector.shape_cast %171 : vector<8x1xi1> to vector<8x1xi1>
    %173 = vector.broadcast %172 : vector<8x1xi1> to vector<8x100xi1>
    %174 = vector.broadcast %cst_60 : f32 to vector<8x100xf32>
    %175 = arith.select %173, %168, %174 : vector<8x100xi1>, vector<8x100xf32>
    %cst_61 = arith.constant dense<0xFF800000> : vector<100xf32>
    %176 = vector.multi_reduction <maximumf>, %175, %cst_61 [0] : vector<8x100xf32> to vector<100xf32>
    %177 = vector.shape_cast %176 : vector<100xf32> to vector<1x100xf32>
    %cst_62 = arith.constant dense<0.000000e+00> : vector<100xf32>
    %178 = vector.multi_reduction <add>, %168, %cst_62 [0] : vector<8x100xf32> to vector<100xf32>
    %179 = vector.shape_cast %178 : vector<100xf32> to vector<1x100xf32>
    %cst_63 = arith.constant 5.000000e-01 : f32
    %180 = vector.broadcast %cst_63 : f32 to vector<1x100xf32>
    %181 = arith.mulf %179, %180 : vector<1x100xf32>
    %c0_i32_64 = arith.constant 0 : i32
    %182 = vector.broadcast %c0_i32_64 : i32 to vector<2x1xi32>
    %183 = arith.cmpi eq, %165, %182 : vector<2x1xi32>
    %184 = arith.extui %183 : vector<2x1xi1> to vector<2x1xi32>
    %185 = arith.sitofp %184 : vector<2x1xi32> to vector<2x1xf32>
    %186 = vector.broadcast %185 : vector<2x1xf32> to vector<2x100xf32>
    %187 = vector.broadcast %177 : vector<1x100xf32> to vector<2x100xf32>
    %188 = arith.mulf %186, %187 : vector<2x100xf32>
    %189 = arith.addf %166, %188 : vector<2x100xf32>
    %190 = vector.broadcast %185 : vector<2x1xf32> to vector<2x100xf32>
    %191 = vector.broadcast %181 : vector<1x100xf32> to vector<2x100xf32>
    %192 = arith.mulf %190, %191 : vector<2x100xf32>
    %193 = arith.addf %167, %192 : vector<2x100xf32>
    %194 = vector.extract_strided_slice %164 {offsets = [8, 0], sizes = [8, 100], strides = [1, 1]} : vector<16x100xf32> to vector<8x100xf32>
    %195 = vector.extract_strided_slice %160 {offsets = [8, 0], sizes = [8, 1], strides = [1, 1]} : vector<16x1xf32> to vector<8x1xf32>
    %cst_65 = arith.constant 0.000000e+00 : f32
    %196 = vector.broadcast %cst_65 : f32 to vector<8x1xf32>
    %197 = arith.cmpf ogt, %195, %196 : vector<8x1xf32>
    %cst_66 = arith.constant -1.000000e+30 : f32
    %198 = vector.shape_cast %197 : vector<8x1xi1> to vector<8x1xi1>
    %199 = vector.broadcast %198 : vector<8x1xi1> to vector<8x100xi1>
    %200 = vector.broadcast %cst_66 : f32 to vector<8x100xf32>
    %201 = arith.select %199, %194, %200 : vector<8x100xi1>, vector<8x100xf32>
    %cst_67 = arith.constant dense<0xFF800000> : vector<100xf32>
    %202 = vector.multi_reduction <maximumf>, %201, %cst_67 [0] : vector<8x100xf32> to vector<100xf32>
    %203 = vector.shape_cast %202 : vector<100xf32> to vector<1x100xf32>
    %cst_68 = arith.constant dense<0.000000e+00> : vector<100xf32>
    %204 = vector.multi_reduction <add>, %194, %cst_68 [0] : vector<8x100xf32> to vector<100xf32>
    %205 = vector.shape_cast %204 : vector<100xf32> to vector<1x100xf32>
    %cst_69 = arith.constant 5.000000e-01 : f32
    %206 = vector.broadcast %cst_69 : f32 to vector<1x100xf32>
    %207 = arith.mulf %205, %206 : vector<1x100xf32>
    %c1_i32_70 = arith.constant 1 : i32
    %208 = vector.broadcast %c1_i32_70 : i32 to vector<2x1xi32>
    %209 = arith.cmpi eq, %165, %208 : vector<2x1xi32>
    %210 = arith.extui %209 : vector<2x1xi1> to vector<2x1xi32>
    %211 = arith.sitofp %210 : vector<2x1xi32> to vector<2x1xf32>
    %212 = vector.broadcast %211 : vector<2x1xf32> to vector<2x100xf32>
    %213 = vector.broadcast %203 : vector<1x100xf32> to vector<2x100xf32>
    %214 = arith.mulf %212, %213 : vector<2x100xf32>
    %215 = arith.addf %189, %214 : vector<2x100xf32>
    %216 = vector.broadcast %211 : vector<2x1xf32> to vector<2x100xf32>
    %217 = vector.broadcast %207 : vector<1x100xf32> to vector<2x100xf32>
    %218 = arith.mulf %216, %217 : vector<2x100xf32>
    %219 = arith.addf %193, %218 : vector<2x100xf32>
    %c208 = arith.constant 208 : index
    %c0_71 = arith.constant 0 : index
    %220 = vector.load %arg4[%c208, %c0_71] : memref<672x128xf32, #tpu.memory_space<vmem>>, vector<64x64xf32>
    %cst_72 = arith.constant dense<0.000000e+00> : vector<2x64xf32>
    %221 = tpu.matmul %105, %220, %cst_72 {dimension_numbers = #tpu.dot_dimension_numbers<[1], [0], [0], [1], [0, 0, 1, 1], [], []>} : vector<2x64xf32>, vector<64x64xf32>, vector<2x64xf32> -> vector<2x64xf32>
    %c272 = arith.constant 272 : index
    %c0_73 = arith.constant 0 : index
    %222 = vector.load %arg4[%c272, %c0_73] : memref<672x128xf32, #tpu.memory_space<vmem>>, vector<64x64xf32>
    %cst_74 = arith.constant dense<0.000000e+00> : vector<2x64xf32>
    %223 = tpu.matmul %109, %222, %cst_74 {dimension_numbers = #tpu.dot_dimension_numbers<[1], [0], [0], [1], [0, 0, 1, 1], [], []>} : vector<2x64xf32>, vector<64x64xf32>, vector<2x64xf32> -> vector<2x64xf32>
    %224 = arith.addf %221, %223 : vector<2x64xf32>
    %c336 = arith.constant 336 : index
    %c0_75 = arith.constant 0 : index
    %225 = vector.load %arg4[%c336, %c0_75] : memref<672x128xf32, #tpu.memory_space<vmem>>, vector<100x64xf32>
    %cst_76 = arith.constant dense<0.000000e+00> : vector<2x64xf32>
    %226 = tpu.matmul %215, %225, %cst_76 {dimension_numbers = #tpu.dot_dimension_numbers<[1], [0], [0], [1], [0, 0, 1, 1], [], []>} : vector<2x100xf32>, vector<100x64xf32>, vector<2x64xf32> -> vector<2x64xf32>
    %227 = arith.addf %224, %226 : vector<2x64xf32>
    %c440 = arith.constant 440 : index
    %c0_77 = arith.constant 0 : index
    %228 = vector.load %arg4[%c440, %c0_77] : memref<672x128xf32, #tpu.memory_space<vmem>>, vector<100x64xf32>
    %cst_78 = arith.constant dense<0.000000e+00> : vector<2x64xf32>
    %229 = tpu.matmul %219, %228, %cst_78 {dimension_numbers = #tpu.dot_dimension_numbers<[1], [0], [0], [1], [0, 0, 1, 1], [], []>} : vector<2x100xf32>, vector<100x64xf32>, vector<2x64xf32> -> vector<2x64xf32>
    %230 = arith.addf %227, %229 : vector<2x64xf32>
    %c544 = arith.constant 544 : index
    %c0_79 = arith.constant 0 : index
    %231 = vector.load %arg4[%c544, %c0_79] : memref<672x128xf32, #tpu.memory_space<vmem>>, vector<1x64xf32>
    %232 = vector.broadcast %231 : vector<1x64xf32> to vector<2x64xf32>
    %233 = arith.addf %230, %232 : vector<2x64xf32>
    %cst_80 = arith.constant 0.000000e+00 : f32
    %234 = vector.broadcast %cst_80 : f32 to vector<2x64xf32>
    %235 = arith.maximumf %233, %234 : vector<2x64xf32>
    %c552 = arith.constant 552 : index
    %c0_81 = arith.constant 0 : index
    %236 = vector.load %arg4[%c552, %c0_81] : memref<672x128xf32, #tpu.memory_space<vmem>>, vector<64x36xf32>
    %cst_82 = arith.constant dense<0.000000e+00> : vector<2x36xf32>
    %237 = tpu.matmul %235, %236, %cst_82 {dimension_numbers = #tpu.dot_dimension_numbers<[1], [0], [0], [1], [0, 0, 1, 1], [], []>} : vector<2x64xf32>, vector<64x36xf32>, vector<2x36xf32> -> vector<2x36xf32>
    %c616 = arith.constant 616 : index
    %c0_83 = arith.constant 0 : index
    %238 = vector.load %arg4[%c616, %c0_83] : memref<672x128xf32, #tpu.memory_space<vmem>>, vector<1x36xf32>
    %239 = vector.broadcast %238 : vector<1x36xf32> to vector<2x36xf32>
    %240 = arith.addf %237, %239 : vector<2x36xf32>
    %cst_84 = arith.constant 0.000000e+00 : f32
    %241 = vector.broadcast %cst_84 : f32 to vector<2x36xf32>
    %242 = arith.maximumf %240, %241 : vector<2x36xf32>
    %c624 = arith.constant 624 : index
    %c0_85 = arith.constant 0 : index
    %243 = vector.load %arg4[%c624, %c0_85] : memref<672x128xf32, #tpu.memory_space<vmem>>, vector<36x3xf32>
    %cst_86 = arith.constant dense<0.000000e+00> : vector<2x3xf32>
    %244 = tpu.matmul %242, %243, %cst_86 {dimension_numbers = #tpu.dot_dimension_numbers<[1], [0], [0], [1], [0, 0, 1, 1], [], []>} : vector<2x36xf32>, vector<36x3xf32>, vector<2x3xf32> -> vector<2x3xf32>
    %c664 = arith.constant 664 : index
    %c0_87 = arith.constant 0 : index
    %245 = vector.load %arg4[%c664, %c0_87] : memref<672x128xf32, #tpu.memory_space<vmem>>, vector<1x3xf32>
    %246 = vector.broadcast %245 : vector<1x3xf32> to vector<2x3xf32>
    %247 = arith.addf %244, %246 : vector<2x3xf32>
    %248 = tpu.iota {dimensions = array<i32: 1>} : vector<2x3xi32>
    %c0_i32_88 = arith.constant 0 : i32
    %249 = vector.broadcast %c0_i32_88 : i32 to vector<2x3xi32>
    %250 = arith.cmpi eq, %248, %249 : vector<2x3xi32>
    %cst_89 = arith.constant 0.000000e+00 : f32
    %251 = vector.broadcast %cst_89 : f32 to vector<2x3xf32>
    %252 = arith.subf %251, %247 : vector<2x3xf32>
    %253 = math.exp %252 : vector<2x3xf32>
    %cst_90 = arith.constant 1.000000e+00 : f32
    %254 = vector.broadcast %cst_90 : f32 to vector<2x3xf32>
    %255 = arith.addf %254, %253 : vector<2x3xf32>
    %cst_91 = arith.constant 1.000000e+00 : f32
    %256 = vector.broadcast %cst_91 : f32 to vector<2x3xf32>
    %257 = arith.divf %256, %255 : vector<2x3xf32>
    %258 = arith.select %250, %257, %247 : vector<2x3xi1>, vector<2x3xf32>
    %c0_92 = arith.constant 0 : index
    %c0_93 = arith.constant 0 : index
    %259 = vector.load %arg5[%c0_92, %c0_93] : memref<2x3xf32, #tpu.memory_space<vmem>>, vector<2x3xf32>
    tpu.vector_store %arg5[%c0_92, %c0_93], %258 {strides = array<i32>} : memref<2x3xf32, #tpu.memory_space<vmem>>, vector<2x3xf32>,
    return
  }
  func.func @transform_0(%arg0: i32) -> (i32, i32) {
    %c0_i32 = arith.constant 0 : i32
    %c0_i32_0 = arith.constant 0 : i32
    %c0_i32_1 = arith.constant 0 : i32
    return %c0_i32, %c0_i32_0 : i32, i32
  }
  func.func @transform_1(%arg0: i32) -> (i32, i32) {
    %c0_i32 = arith.constant 0 : i32
    %c0_i32_0 = arith.constant 0 : i32
    %c0_i32_1 = arith.constant 0 : i32
    return %c0_i32, %c0_i32_0 : i32, i32
  }
  func.func @transform_2(%arg0: i32) -> (i32, i32) {
    %c0_i32 = arith.constant 0 : i32
    %c0_i32_0 = arith.constant 0 : i32
    %c0_i32_1 = arith.constant 0 : i32
    return %c0_i32, %c0_i32_0 : i32, i32
  }
  func.func @transform_3(%arg0: i32) -> (i32, i32) {
    %c0_i32 = arith.constant 0 : i32
    %c0_i32_0 = arith.constant 0 : i32
    %c0_i32_1 = arith.constant 0 : i32
    return %c0_i32, %c0_i32_0 : i32, i32
  }
  func.func @transform_4(%arg0: i32) -> (i32, i32) {
    %c0_i32 = arith.constant 0 : i32
    %c0_i32_0 = arith.constant 0 : i32
    %c0_i32_1 = arith.constant 0 : i32
    return %c0_i32, %c0_i32_0 : i32, i32
  }
}

</mosaic_0001>

<llo_original>
// kernel: gin_att_net_forward.1
$region0: #{gin_att_net_forward.1}
  #allocation0 [shape = 'u32[]', space=smem, size = 0x4, offset = 0x4, fixed_abs, tag = 'smem constant byte address 0x4 - core index']
  #allocation1 [shape = 'u32[144,128]{1,0:T(1,128)}', space=vmem, size = 0x12000, scoped, tag = 'internal scratch']
  %s0 = inlined_call_operand.hbm [shape: f32[16,64], index: 0, kind: input, shape index: {}]
  %s1 = inlined_call_operand.hbm [shape: f32[16,16], index: 1, kind: input, shape index: {}]
  %s2 = inlined_call_operand.hbm [shape: f32[32,16], index: 2, kind: input, shape index: {}]
  %s3 = inlined_call_operand.hbm [shape: f32[672,128], index: 3, kind: input, shape index: {}]
  %s4 = inlined_call_operand.vmem [shape: f32[2,3], index: 4, kind: output, shape index: {}]
  %s5 = sld [smem:[#allocation0]]
  $region42: #{gin_att_net_forward.1} parent=0
    _
  %s7 = ssub.s32 1, %s5
  %s8 = scalar_select 0, %s7, %s5
  $region1: #{gin_att_net_forward.1} parent=0
    #allocation2 [shape = 'u8[8192]{0}', space=vmem, size = 0x2000, scoped, tag = 'input window, operand 0, single buffered']
    #allocation3 [shape = 's32[1]{0}', space=sflag, size = 0x4, scoped, tag = 'scoped memory for gin_att_net_forward.1']
    #allocation4 [shape = 'u8[8192]{0}', space=vmem, size = 0x2000, scoped, tag = 'input window, operand 1, single buffered']
    #allocation5 [shape = 's32[1]{0}', space=sflag, size = 0x4, scoped, tag = 'scoped memory for gin_att_net_forward.1']
    #allocation6 [shape = 'u8[16384]{0}', space=vmem, size = 0x4000, scoped, tag = 'input window, operand 2, single buffered']
    #allocation7 [shape = 'u8[344064]{0}', space=vmem, size = 0x54000, scoped, tag = 'input window, operand 3, single buffered']
    #allocation8 [shape = 's32[1]{0}', space=sflag, size = 0x4, scoped, tag = 'scoped memory for gin_att_net_forward.1']
    %9 = vsyncpa [#allocation3], 0
    %10 = vsyncpa [#allocation5], 0
    %11 = vsyncpa [#allocation8], 0
    // Predicated region
    $region2: #{gin_att_net_forward.1} parent=1 // pred_check
      _
    $region3: #{gin_att_net_forward.1} parent=1 // pred_check_branch
      %13 = sbr.rel (0) target = $region5
    $region4: #{gin_att_net_forward.1} parent=1 // pred_region
      %s15 = ssub.s32 256, 256
      %16 = vsyncadd [#allocation3], %s15
      %s17 = sshll.u32 [#allocation2], 4
      %s18 = int_to_ptr.vmem [resolvable:$true] %s17
      %23 = dma.hbm_to_vmem [thread:$0]  %s0, 256, %s18, [#allocation3], 128, 128, 8
    $region5: #{gin_att_net_forward.1} parent=1 // pred_fallthru
      _
    // Predicated region
    $region6: #{gin_att_net_forward.1} parent=1 // pred_check
      _
    $region7: #{gin_att_net_forward.1} parent=1 // pred_check_branch
      %25 = sbr.rel (0) target = $region9
    $region8: #{gin_att_net_forward.1} parent=1 // pred_region
      %s27 = ssub.s32 256, 256
      %28 = vsyncadd [#allocation5], %s27
      %s29 = sshll.u32 [#allocation4], 4
      %s30 = int_to_ptr.vmem [resolvable:$true] %s29
      %35 = dma.hbm_to_vmem [thread:$0]  %s1, 256, %s30, [#allocation5], 128, 128, 8
    $region9: #{gin_att_net_forward.1} parent=1 // pred_fallthru
      _
    // Predicated region
    $region10: #{gin_att_net_forward.1} parent=1 // pred_check
      _
    $region11: #{gin_att_net_forward.1} parent=1 // pred_check_branch
      %37 = sbr.rel (0) target = $region13
    $region12: #{gin_att_net_forward.1} parent=1 // pred_region
      %s39 = ssub.s32 512, 512
      %40 = vsyncadd [#allocation5], %s39
      %s41 = sshll.u32 [#allocation6], 4
      %s42 = int_to_ptr.vmem [resolvable:$true] %s41
      %47 = dma.hbm_to_vmem [thread:$0]  %s2, 512, %s42, [#allocation5], 128, 128, 8
    $region13: #{gin_att_net_forward.1} parent=1 // pred_fallthru
      _
    // Predicated region
    $region14: #{gin_att_net_forward.1} parent=1 // pred_check
      _
    $region15: #{gin_att_net_forward.1} parent=1 // pred_check_branch
      %49 = sbr.rel (0) target = $region17
    $region16: #{gin_att_net_forward.1} parent=1 // pred_region
      %s51 = ssub.s32 10752, 10752
      %52 = vsyncadd [#allocation8], %s51
      %s53 = sshll.u32 [#allocation7], 4
      %s54 = int_to_ptr.vmem [resolvable:$true] %s53
      %59 = dma.hbm_to_vmem [thread:$0]  %s3, 10752, %s54, [#allocation8], 128, 128, 8
    $region17: #{gin_att_net_forward.1} parent=1 // pred_fallthru
      _
    // Predicated region
    $region18: #{gin_att_net_forward.1} parent=1 // pred_check
      _
    $region19: #{gin_att_net_forward.1} parent=1 // pred_check_branch
      %61 = sbr.rel (0) target = $region21
    $region20: #{gin_att_net_forward.1} parent=1 // pred_region
      %62 = dma.done [#allocation3], 256
    $region21: #{gin_att_net_forward.1} parent=1 // pred_fallthru
      _
    // Predicated region
    $region22: #{gin_att_net_forward.1} parent=1 // pred_check
      _
    $region23: #{gin_att_net_forward.1} parent=1 // pred_check_branch
      %64 = sbr.rel (0) target = $region25
    $region24: #{gin_att_net_forward.1} parent=1 // pred_region
      %65 = dma.done [#allocation5], 256
    $region25: #{gin_att_net_forward.1} parent=1 // pred_fallthru
      _
    // Predicated region
    $region26: #{gin_att_net_forward.1} parent=1 // pred_check
      _
    $region27: #{gin_att_net_forward.1} parent=1 // pred_check_branch
      %67 = sbr.rel (0) target = $region29
    $region28: #{gin_att_net_forward.1} parent=1 // pred_region
      %68 = dma.done [#allocation5], 512
    $region29: #{gin_att_net_forward.1} parent=1 // pred_fallthru
      _
    // Predicated region
    $region30: #{gin_att_net_forward.1} parent=1 // pred_check
      _
    $region31: #{gin_att_net_forward.1} parent=1 // pred_check_branch
      %70 = sbr.rel (0) target = $region33
    $region32: #{gin_att_net_forward.1} parent=1 // pred_region
      %71 = dma.done [#allocation8], 10752
    $region33: #{gin_att_net_forward.1} parent=1 // pred_fallthru
      _
    %v72 = vld [vmem:[#allocation2] sm:$0xff]
    %v73 = vld [vmem:[#allocation2 + $0x8] sm:$0xff]
    %v74 = vld [vmem:[#allocation4] sm:$0xff]
    %v75 = vld [vmem:[#allocation4 + $0x8] sm:$0xff]
    %v76 = vld [vmem:[#allocation6] sm:$0xff]
    %v77 = vld [vmem:[#allocation6 + $0x8] sm:$0xff]
    %v78 = vld [vmem:[#allocation6 + $0x10] sm:$0xff]
    %v79 = vld [vmem:[#allocation6 + $0x18] sm:$0xff]
    %v80 = vld [vmem:[#allocation7] sm:$0xff]
    %v81 = vld [vmem:[#allocation7 + $0x8] sm:$0xff]
    %v82 = vld [vmem:[#allocation7 + $0x10] sm:$0xff]
    %v83 = vld [vmem:[#allocation7 + $0x18] sm:$0xff]
    %v84 = vld [vmem:[#allocation7 + $0x20] sm:$0xff]
    %v85 = vld [vmem:[#allocation7 + $0x28] sm:$0xff]
    %v86 = vld [vmem:[#allocation7 + $0x30] sm:$0xff]
    %v87 = vld [vmem:[#allocation7 + $0x38] sm:$0xff]
    %v88 = vld [vmem:[#allocation7 + $0x40] sm:$0x1]
    %vm89 = vcmask 130048
    %v91 = vsel %vm89, %v74, 0
    %v94 = vsel %vm89, %v75, 0
    %96 = vmatprep.subr.mxu0 0.0
    %97 = vmatpush1.msra.mxu0 %v72
    %98 = vmatprep.subr.mxu0 0.0
    %99 = vmatpush1.msra.mxu0 %v73
    %100 = vmatprep.subr.mxu0 0.0
    %101 = vmatpush1.msra.mxu0 0.0
    %102 = vmatprep.subr.mxu0 0.0
    %103 = vmatpush1.msra.mxu0 0.0
    %104 = vmatprep.subr.mxu0 0.0
    %105 = vmatpush1.msra.mxu0 0.0
    %106 = vmatprep.subr.mxu0 0.0
    %107 = vmatpush1.msra.mxu0 0.0
    %108 = vmatprep.subr.mxu0 0.0
    %109 = vmatpush1.msra.mxu0 0.0
    %110 = vmatprep.subr.mxu0 0.0
    %111 = vmatpush1.msra.mxu0 0.0
    %112 = vmatprep.subr.mxu0 0.0
    %113 = vmatpush1.msra.mxu0 0.0
    %114 = vmatprep.subr.mxu0 0.0
    %115 = vmatpush1.msra.mxu0 0.0
    %116 = vmatprep.subr.mxu0 0.0
    %117 = vmatpush1.msra.mxu0 0.0
    %118 = vmatprep.subr.mxu0 0.0
    %119 = vmatpush1.msra.mxu0 0.0
    %120 = vmatprep.subr.mxu0 0.0
    %121 = vmatpush1.msra.mxu0 0.0
    %122 = vmatprep.subr.mxu0 0.0
    %123 = vmatpush1.msra.mxu0 0.0
    %124 = vmatprep.subr.mxu0 0.0
    %125 = vmatpush1.msra.mxu0 0.0
    %126 = vmatprep.subr.mxu0 0.0
    %127 = vmatpush1.msra.mxu0 0.0
    %128 = vmatprep.subr.mxu0 0.0
    %129 = vmatpush1.msra.mxu0 0.0
    %130 = vmatprep.subr.mxu0 0.0
    %131 = vmatpush1.msra.mxu0 0.0
    %132 = vmatprep.subr.mxu0 0.0
    %133 = vmatpush1.msra.mxu0 0.0
    %134 = vmatprep.subr.mxu0 0.0
    %135 = vmatpush1.msra.mxu0 0.0
    %136 = vmatprep.subr.mxu0 0.0
    %137 = vmatpush1.msra.mxu0 0.0
    %138 = vmatprep.subr.mxu0 0.0
    %139 = vmatpush1.msra.mxu0 0.0
    %140 = vmatprep.subr.mxu0 0.0
    %141 = vmatpush1.msra.mxu0 0.0
    %142 = vmatprep.subr.mxu0 0.0
    %143 = vmatpush1.msra.mxu0 0.0
    %144 = vmatprep.subr.mxu0 0.0
    %145 = vmatpush1.msra.mxu0 0.0
    %146 = vmatprep.subr.mxu0 0.0
    %147 = vmatpush1.msra.mxu0 0.0
    %148 = vmatprep.subr.mxu0 0.0
    %149 = vmatpush1.msra.mxu0 0.0
    %150 = vmatprep.subr.mxu0 0.0
    %151 = vmatpush1.msra.mxu0 0.0
    %152 = vmatprep.subr.mxu0 0.0
    %153 = vmatpush1.msra.mxu0 0.0
    %154 = vmatprep.subr.mxu0 0.0
    %155 = vmatpush1.msra.mxu0 0.0
    %156 = vmatprep.subr.mxu0 0.0
    %157 = vmatpush1.msra.mxu0 0.0
    %158 = vmatprep.subr.mxu0 0.0
    %159 = vmatpush1.msra.mxu0 0.0
    %160 = vmatprep.mubr.f32.mxu0 0.0
    %161 = vmatmul.mubr.f32.gmra.mrb[0].mxu0 %v91
    %v162 = vpop.f32.mrb[0].mxu0
    %v163 = vadd.f32 0.0, %v162
    %v164 = vpop.f32.mrb[0].mxu0
    %165 = vmatprep.mubr.f32.mxu0 0.0
    %166 = vmatmul.mubr.f32.gmra.mrb[0].mxu0 %v94
    %v167 = vpop.f32.mrb[0].mxu0
    %v168 = vadd.f32 0.0, %v167
    %v169 = vpop.f32.mrb[0].mxu0
    %170 = vdwg.mxu0
    %v171 = vmul.f32 %v72, 65.0
    %v172 = vmul.f32 %v73, 65.0
    %v173 = vadd.f32 %v171, %v163
    %v174 = vadd.f32 %v172, %v168
    %v175 = vlaneseq
    %v176 = vshrl.u32 %v175, 7
    %v177 = vsub.s32 0, %v176
    %v178 = vrot.slane %v88, %v177
    %vm179 = vcmask 523264
    %v181 = vsel %vm179, %v173, 0
    %v184 = vsel %vm179, %v174, 0
    %186 = vmatprep.subr.mxu0 0.0
    %187 = vmatpush1.msra.mxu0 %v80
    %188 = vmatprep.subr.mxu0 0.0
    %189 = vmatpush1.msra.mxu0 %v81
    %190 = vmatprep.subr.mxu0 0.0
    %191 = vmatpush1.msra.mxu0 %v82
    %192 = vmatprep.subr.mxu0 0.0
    %193 = vmatpush1.msra.mxu0 %v83
    %194 = vmatprep.subr.mxu0 0.0
    %195 = vmatpush1.msra.mxu0 %v84
    %196 = vmatprep.subr.mxu0 0.0
    %197 = vmatpush1.msra.mxu0 %v85
    %198 = vmatprep.subr.mxu0 0.0
    %199 = vmatpush1.msra.mxu0 %v86
    %200 = vmatprep.subr.mxu0 0.0
    %201 = vmatpush1.msra.mxu0 %v87
    %202 = vmatprep.subr.mxu0 0.0
    %203 = vmatpush1.msra.mxu0 0.0
    %204 = vmatprep.subr.mxu0 0.0
    %205 = vmatpush1.msra.mxu0 0.0
    %206 = vmatprep.subr.mxu0 0.0
    %207 = vmatpush1.msra.mxu0 0.0
    %208 = vmatprep.subr.mxu0 0.0
    %209 = vmatpush1.msra.mxu0 0.0
    %210 = vmatprep.subr.mxu0 0.0
    %211 = vmatpush1.msra.mxu0 0.0
    %212 = vmatprep.subr.mxu0 0.0
    %213 = vmatpush1.msra.mxu0 0.0
    %214 = vmatprep.subr.mxu0 0.0
    %215 = vmatpush1.msra.mxu0 0.0
    %216 = vmatprep.subr.mxu0 0.0
    %217 = vmatpush1.msra.mxu0 0.0
    %218 = vmatprep.subr.mxu0 0.0
    %219 = vmatpush1.msra.mxu0 0.0
    %220 = vmatprep.subr.mxu0 0.0
    %221 = vmatpush1.msra.mxu0 0.0
    %222 = vmatprep.subr.mxu0 0.0
    %223 = vmatpush1.msra.mxu0 0.0
    %224 = vmatprep.subr.mxu0 0.0
    %225 = vmatpush1.msra.mxu0 0.0
    %226 = vmatprep.subr.mxu0 0.0
    %227 = vmatpush1.msra.mxu0 0.0
    %228 = vmatprep.subr.mxu0 0.0
    %229 = vmatpush1.msra.mxu0 0.0
    %230 = vmatprep.subr.mxu0 0.0
    %231 = vmatpush1.msra.mxu0 0.0
    %232 = vmatprep.subr.mxu0 0.0
    %233 = vmatpush1.msra.mxu0 0.0
    %234 = vmatprep.subr.mxu0 0.0
    %235 = vmatpush1.msra.mxu0 0.0
    %236 = vmatprep.subr.mxu0 0.0
    %237 = vmatpush1.msra.mxu0 0.0
    %238 = vmatprep.subr.mxu0 0.0
    %239 = vmatpush1.msra.mxu0 0.0
    %240 = vmatprep.subr.mxu0 0.0
    %241 = vmatpush1.msra.mxu0 0.0
    %242 = vmatprep.subr.mxu0 0.0
    %243 = vmatpush1.msra.mxu0 0.0
    %244 = vmatprep.subr.mxu0 0.0
    %245 = vmatpush1.msra.mxu0 0.0
    %246 = vmatprep.subr.mxu0 0.0
    %247 = vmatpush1.msra.mxu0 0.0
    %248 = vmatprep.subr.mxu0 0.0
    %249 = vmatpush1.msra.mxu0 0.0
    %250 = vmatprep.mubr.f32.mxu0 0.0
    %251 = vmatmul.mubr.f32.gmra.mrb[0].mxu0 %v181
    %v252 = vpop.f32.mrb[0].mxu0
    %v253 = vadd.f32 %v178, %v252
    %v254 = vpop.f32.mrb[0].mxu0
    %255 = vmatprep.mubr.f32.mxu0 0.0
    %256 = vmatmul.mubr.f32.gmra.mrb[0].mxu0 %v184
    %v257 = vpop.f32.mrb[0].mxu0
    %v258 = vadd.f32 %v178, %v257
    %v259 = vpop.f32.mrb[0].mxu0
    %260 = vdwg.mxu0
    %v261 = vmax.f32 %v253, 0.0
    %v262 = vmax.f32 %v258, 0.0
    %v263 = vld [vmem:[#allocation7 + $0x48] sm:$0xff]
    %v264 = vld [vmem:[#allocation7 + $0x50] sm:$0x1]
    %v265 = vlaneseq
    %v266 = vshrl.u32 %v265, 7
    %v267 = vsub.s32 0, %v266
    %v268 = vrot.slane %v264, %v267
    %vm269 = vcmask 64512
    %v271 = vsel %vm269, %v261, 0
    %v274 = vsel %vm269, %v262, 0
    %276 = vmatprep.subr.mxu0 0.0
    %277 = vmatpush1.msra.mxu0 %v263
    %278 = vmatprep.subr.mxu0 0.0
    %279 = vmatpush1.msra.mxu0 0.0
    %280 = vmatprep.subr.mxu0 0.0
    %281 = vmatpush1.msra.mxu0 0.0
    %282 = vmatprep.subr.mxu0 0.0
    %283 = vmatpush1.msra.mxu0 0.0
    %284 = vmatprep.subr.mxu0 0.0
    %285 = vmatpush1.msra.mxu0 0.0
    %286 = vmatprep.subr.mxu0 0.0
    %287 = vmatpush1.msra.mxu0 0.0
    %288 = vmatprep.subr.mxu0 0.0
    %289 = vmatpush1.msra.mxu0 0.0
    %290 = vmatprep.subr.mxu0 0.0
    %291 = vmatpush1.msra.mxu0 0.0
    %292 = vmatprep.subr.mxu0 0.0
    %293 = vmatpush1.msra.mxu0 0.0
    %294 = vmatprep.subr.mxu0 0.0
    %295 = vmatpush1.msra.mxu0 0.0
    %296 = vmatprep.subr.mxu0 0.0
    %297 = vmatpush1.msra.mxu0 0.0
    %298 = vmatprep.subr.mxu0 0.0
    %299 = vmatpush1.msra.mxu0 0.0
    %300 = vmatprep.subr.mxu0 0.0
    %301 = vmatpush1.msra.mxu0 0.0
    %302 = vmatprep.subr.mxu0 0.0
    %303 = vmatpush1.msra.mxu0 0.0
    %304 = vmatprep.subr.mxu0 0.0
    %305 = vmatpush1.msra.mxu0 0.0
    %306 = vmatprep.subr.mxu0 0.0
    %307 = vmatpush1.msra.mxu0 0.0
    %308 = vmatprep.subr.mxu0 0.0
    %309 = vmatpush1.msra.mxu0 0.0
    %310 = vmatprep.subr.mxu0 0.0
    %311 = vmatpush1.msra.mxu0 0.0
    %312 = vmatprep.subr.mxu0 0.0
    %313 = vmatpush1.msra.mxu0 0.0
    %314 = vmatprep.subr.mxu0 0.0
    %315 = vmatpush1.msra.mxu0 0.0
    %316 = vmatprep.subr.mxu0 0.0
    %317 = vmatpush1.msra.mxu0 0.0
    %318 = vmatprep.subr.mxu0 0.0
    %319 = vmatpush1.msra.mxu0 0.0
    %320 = vmatprep.subr.mxu0 0.0
    %321 = vmatpush1.msra.mxu0 0.0
    %322 = vmatprep.subr.mxu0 0.0
    %323 = vmatpush1.msra.mxu0 0.0
    %324 = vmatprep.subr.mxu0 0.0
    %325 = vmatpush1.msra.mxu0 0.0
    %326 = vmatprep.subr.mxu0 0.0
    %327 = vmatpush1.msra.mxu0 0.0
    %328 = vmatprep.subr.mxu0 0.0
    %329 = vmatpush1.msra.mxu0 0.0
    %330 = vmatprep.subr.mxu0 0.0
    %331 = vmatpush1.msra.mxu0 0.0
    %332 = vmatprep.subr.mxu0 0.0
    %333 = vmatpush1.msra.mxu0 0.0
    %334 = vmatprep.subr.mxu0 0.0
    %335 = vmatpush1.msra.mxu0 0.0
    %336 = vmatprep.subr.mxu0 0.0
    %337 = vmatpush1.msra.mxu0 0.0
    %338 = vmatprep.subr.mxu0 0.0
    %339 = vmatpush1.msra.mxu0 0.0
    %340 = vmatprep.mubr.f32.mxu0 0.0
    %341 = vmatmul.mubr.f32.gmra.mrb[0].mxu0 %v271
    %v342 = vpop.f32.mrb[0].mxu0
    %v343 = vadd.f32 %v268, %v342
    %v344 = vpop.f32.mrb[0].mxu0
    %345 = vmatprep.mubr.f32.mxu0 0.0
    %346 = vmatmul.mubr.f32.gmra.mrb[0].mxu0 %v274
    %v347 = vpop.f32.mrb[0].mxu0
    %v348 = vadd.f32 %v268, %v347
    %v349 = vpop.f32.mrb[0].mxu0
    %350 = vdwg.mxu0
    %v351 = vld [vmem:[#allocation7 + $0x58] sm:$0xff]
    %v352 = vld [vmem:[#allocation7 + $0x60] sm:$0x1]
    %v353 = vlaneseq
    %v354 = vshrl.u32 %v353, 7
    %v355 = vsub.s32 0, %v354
    %v356 = vrot.slane %v352, %v355
    %357 = vmatprep.subr.mxu0 0.0
    %358 = vmatpush1.msra.mxu0 %v351
    %359 = vmatprep.subr.mxu0 0.0
    %360 = vmatpush1.msra.mxu0 0.0
    %361 = vmatprep.subr.mxu0 0.0
    %362 = vmatpush1.msra.mxu0 0.0
    %363 = vmatprep.subr.mxu0 0.0
    %364 = vmatpush1.msra.mxu0 0.0
    %365 = vmatprep.subr.mxu0 0.0
    %366 = vmatpush1.msra.mxu0 0.0
    %367 = vmatprep.subr.mxu0 0.0
    %368 = vmatpush1.msra.mxu0 0.0
    %369 = vmatprep.subr.mxu0 0.0
    %370 = vmatpush1.msra.mxu0 0.0
    %371 = vmatprep.subr.mxu0 0.0
    %372 = vmatpush1.msra.mxu0 0.0
    %373 = vmatprep.subr.mxu0 0.0
    %374 = vmatpush1.msra.mxu0 0.0
    %375 = vmatprep.subr.mxu0 0.0
    %376 = vmatpush1.msra.mxu0 0.0
    %377 = vmatprep.subr.mxu0 0.0
    %378 = vmatpush1.msra.mxu0 0.0
    %379 = vmatprep.subr.mxu0 0.0
    %380 = vmatpush1.msra.mxu0 0.0
    %381 = vmatprep.subr.mxu0 0.0
    %382 = vmatpush1.msra.mxu0 0.0
    %383 = vmatprep.subr.mxu0 0.0
    %384 = vmatpush1.msra.mxu0 0.0
    %385 = vmatprep.subr.mxu0 0.0
    %386 = vmatpush1.msra.mxu0 0.0
    %387 = vmatprep.subr.mxu0 0.0
    %388 = vmatpush1.msra.mxu0 0.0
    %389 = vmatprep.subr.mxu0 0.0
    %390 = vmatpush1.msra.mxu0 0.0
    %391 = vmatprep.subr.mxu0 0.0
    %392 = vmatpush1.msra.mxu0 0.0
    %393 = vmatprep.subr.mxu0 0.0
    %394 = vmatpush1.msra.mxu0 0.0
    %395 = vmatprep.subr.mxu0 0.0
    %396 = vmatpush1.msra.mxu0 0.0
    %397 = vmatprep.subr.mxu0 0.0
    %398 = vmatpush1.msra.mxu0 0.0
    %399 = vmatprep.subr.mxu0 0.0
    %400 = vmatpush1.msra.mxu0 0.0
    %401 = vmatprep.subr.mxu0 0.0
    %402 = vmatpush1.msra.mxu0 0.0
    %403 = vmatprep.subr.mxu0 0.0
    %404 = vmatpush1.msra.mxu0 0.0
    %405 = vmatprep.subr.mxu0 0.0
    %406 = vmatpush1.msra.mxu0 0.0
    %407 = vmatprep.subr.mxu0 0.0
    %408 = vmatpush1.msra.mxu0 0.0
    %409 = vmatprep.subr.mxu0 0.0
    %410 = vmatpush1.msra.mxu0 0.0
    %411 = vmatprep.subr.mxu0 0.0
    %412 = vmatpush1.msra.mxu0 0.0
    %413 = vmatprep.subr.mxu0 0.0
    %414 = vmatpush1.msra.mxu0 0.0
    %415 = vmatprep.subr.mxu0 0.0
    %416 = vmatpush1.msra.mxu0 0.0
    %417 = vmatprep.subr.mxu0 0.0
    %418 = vmatpush1.msra.mxu0 0.0
    %419 = vmatprep.subr.mxu0 0.0
    %420 = vmatpush1.msra.mxu0 0.0
    %421 = vmatprep.mubr.f32.mxu0 0.0
    %422 = vmatmul.mubr.f32.gmra.mrb[0].mxu0 %v271
    %v423 = vpop.f32.mrb[0].mxu0
    %v424 = vadd.f32 %v356, %v423
    %v425 = vpop.f32.mrb[0].mxu0
    %426 = vmatprep.mubr.f32.mxu0 0.0
    %427 = vmatmul.mubr.f32.gmra.mrb[0].mxu0 %v274
    %v428 = vpop.f32.mrb[0].mxu0
    %v429 = vadd.f32 %v356, %v428
    %v430 = vpop.f32.mrb[0].mxu0
    %431 = vdwg.mxu0
    %v432 = vsub.f32 0.0, %v424
    %v433 = vsub.f32 0.0, %v429
    %v434 = vmul.f32 %v432, 1.442695
    %v435 = vpow.pop %v434
    %v436 = vmul.f32 %v433, 1.442695
    %v437 = vpow.pop %v436
    %v438 = vadd.f32 %v435, 1.0
    %v439 = vadd.f32 %v437, 1.0
    %v440 = vrcp.pop %v438
    %v441 = vmul.f32 1.0, %v440
    %v442 = vrcp.pop %v439
    %v443 = vmul.f32 1.0, %v442
    %445 = vset.pattern.permute.xlu0 0
    %446 = vperm.xlu0 %445, %v441
    %v447 = vpop.permute.xlu0 %446
    %450 = vset.pattern.permute.xlu0 0
    %451 = vperm.xlu0 %450, %v443
    %v452 = vpop.permute.xlu0 %451
    %vm454 = vcmask 7168
    %v456 = vsel %vm454, 1.0, 0
    %v458 = vsel %vm454, %v441, 0
    %v460 = vsel %vm454, %v443, 0
    %462 = vmatprep.subr.mxu0 0.0
    %463 = vmatpush1.xpose.msra.mxu0 %v458
    %464 = vmatprep.subr.mxu0 0.0
    %465 = vmatpush1.xpose.msra.mxu0 %v460
    %466 = vmatprep.subr.mxu0 0.0
    %467 = vmatpush1.xpose.msra.mxu0 0.0
    %468 = vmatprep.subr.mxu0 0.0
    %469 = vmatpush1.xpose.msra.mxu0 0.0
    %470 = vmatprep.subr.mxu0 0.0
    %471 = vmatpush1.xpose.msra.mxu0 0.0
    %472 = vmatprep.subr.mxu0 0.0
    %473 = vmatpush1.xpose.msra.mxu0 0.0
    %474 = vmatprep.subr.mxu0 0.0
    %475 = vmatpush1.xpose.msra.mxu0 0.0
    %476 = vmatprep.subr.mxu0 0.0
    %477 = vmatpush1.xpose.msra.mxu0 0.0
    %478 = vmatprep.subr.mxu0 0.0
    %479 = vmatpush1.xpose.msra.mxu0 0.0
    %480 = vmatprep.subr.mxu0 0.0
    %481 = vmatpush1.xpose.msra.mxu0 0.0
    %482 = vmatprep.subr.mxu0 0.0
    %483 = vmatpush1.xpose.msra.mxu0 0.0
    %484 = vmatprep.subr.mxu0 0.0
    %485 = vmatpush1.xpose.msra.mxu0 0.0
    %486 = vmatprep.subr.mxu0 0.0
    %487 = vmatpush1.xpose.msra.mxu0 0.0
    %488 = vmatprep.subr.mxu0 0.0
    %489 = vmatpush1.xpose.msra.mxu0 0.0
    %490 = vmatprep.subr.mxu0 0.0
    %491 = vmatpush1.xpose.msra.mxu0 0.0
    %492 = vmatprep.subr.mxu0 0.0
    %493 = vmatpush1.xpose.msra.mxu0 0.0
    %494 = vmatprep.subr.mxu0 0.0
    %495 = vmatpush1.xpose.msra.mxu0 0.0
    %496 = vmatprep.subr.mxu0 0.0
    %497 = vmatpush1.xpose.msra.mxu0 0.0
    %498 = vmatprep.subr.mxu0 0.0
    %499 = vmatpush1.xpose.msra.mxu0 0.0
    %500 = vmatprep.subr.mxu0 0.0
    %501 = vmatpush1.xpose.msra.mxu0 0.0
    %502 = vmatprep.subr.mxu0 0.0
    %503 = vmatpush1.xpose.msra.mxu0 0.0
    %504 = vmatprep.subr.mxu0 0.0
    %505 = vmatpush1.xpose.msra.mxu0 0.0
    %506 = vmatprep.subr.mxu0 0.0
    %507 = vmatpush1.xpose.msra.mxu0 0.0
    %508 = vmatprep.subr.mxu0 0.0
    %509 = vmatpush1.xpose.msra.mxu0 0.0
    %510 = vmatprep.subr.mxu0 0.0
    %511 = vmatpush1.xpose.msra.mxu0 0.0
    %512 = vmatprep.subr.mxu0 0.0
    %513 = vmatpush1.xpose.msra.mxu0 0.0
    %514 = vmatprep.subr.mxu0 0.0
    %515 = vmatpush1.xpose.msra.mxu0 0.0
    %516 = vmatprep.subr.mxu0 0.0
    %517 = vmatpush1.xpose.msra.mxu0 0.0
    %518 = vmatprep.subr.mxu0 0.0
    %519 = vmatpush1.xpose.msra.mxu0 0.0
    %520 = vmatprep.subr.mxu0 0.0
    %521 = vmatpush1.xpose.msra.mxu0 0.0
    %522 = vmatprep.subr.mxu0 0.0
    %523 = vmatpush1.xpose.msra.mxu0 0.0
    %524 = vmatprep.subr.mxu0 0.0
    %525 = vmatpush1.xpose.msra.mxu0 0.0
    %526 = vmatprep.mubr.f32.mxu0 0.0
    %527 = vmatmul.mubr.f32.gmra.mrb[0].mxu0 %v456
    %v528 = vpop.f32.mrb[0].mxu0
    %v529 = vadd.f32 0.0, %v528
    %v530 = vpop.f32.mrb[0].mxu0
    %531 = vmatprep.mubr.f32.mxu0 0.0
    %532 = vmatmul.mubr.f32.gmra.mrb[0].mxu0 %v456
    %v533 = vpop.f32.mrb[0].mxu0
    %v534 = vadd.f32 0.0, %v533
    %v535 = vpop.f32.mrb[0].mxu0
    %536 = vdwg.mxu0
    %vm537 = vcmp.gt.f32.partialorder %v529, %v447
    %vm538 = vcmp.gt.f32.partialorder %v534, %v452
    %v539 = vsel %vm537, 1, 0
    %v540 = vsel %vm538, 1, 0
    %v541 = vcvt.s32.f32 %v539
    %v542 = vcvt.s32.f32 %v540
    %vm543 = vcmp.eq.f32.partialorder %v529, %v447
    %vm544 = vcmp.eq.f32.partialorder %v534, %v452
    %v545 = vsel %vm543, 1, 0
    %v546 = vsel %vm544, 1, 0
    %v547 = vcvt.s32.f32 %v545
    %v548 = vcvt.s32.f32 %v546
    %v549 = vmul.f32 %v76, %v541
    %v550 = vmul.f32 %v77, %v542
    %v551 = vmul.f32 %v78, %v547
    %v552 = vmul.f32 %v79, %v548
    %v553 = vadd.f32 %v549, %v551
    %v554 = vadd.f32 %v550, %v552
    %v555 = vsel %vm89, %v553, 0.0
    %556 = vadd.xlane.f32.xlu0 %v555
    %v557 = vpop.xlane.xlu0 %556
    %v558 = vsel %vm89, %v554, 0.0
    %559 = vadd.xlane.f32.xlu0 %v558
    %v560 = vpop.xlane.xlu0 %559
    %vm561 = vcmp.lt.f32.partialorder %v557, 4.0
    %vm562 = vcmp.lt.f32.partialorder %v560, 4.0
    %v563 = vsel %vm561, 1, 0
    %v564 = vsel %vm562, 1, 0
    %v565 = vcvt.s32.f32 %v563
    %v566 = vcvt.s32.f32 %v564
    %v567 = vmul.f32 %v343, %v447
    %v568 = vmul.f32 %v348, %v452
    %v569 = vmul.f32 %v567, %v565
    %v570 = vmul.f32 %v568, %v566
    %v571 = vlaneseq
    %v572 = vshrl.u32 %v571, 7
    %vm573 = vcmp.gt.f32.partialorder %v565, 0.0
    %v574 = vsel %vm573, 1, 0
    %vm575 = vcmp.eq.s32.totalorder %v574, 1
    %v576 = vsel %vm575, %v569, -1e+30
    %v577 = vsel %vm179, %v576, -inf
    %v578 = vrot.slane %v577, 4
    %v579 = vmax.f32 %v577, %v578
    %v580 = vrot.slane %v579, 2
    %v581 = vmax.f32 %v579, %v580
    %v582 = vrot.slane %v581, 1
    %v583 = vmax.f32 %v581, %v582
    %v584 = vsel %vm179, %v569, 0.0
    %v585 = vrot.slane %v584, 4
    %v586 = vadd.f32 %v584, %v585
    %v587 = vrot.slane %v586, 2
    %v588 = vadd.f32 %v586, %v587
    %v589 = vrot.slane %v588, 1
    %v590 = vadd.f32 %v588, %v589
    %v591 = vmul.f32 %v590, 0.25
    %vm592 = vcmp.eq.s32.totalorder %v572, 0
    %v593 = vsel %vm592, 1, 0
    %v594 = vcvt.s32.f32 %v593
    %v595 = vmul.f32 %v594, %v583
    %v596 = vadd.f32 %v595, 0.0
    %v597 = vmul.f32 %v594, %v591
    %v598 = vadd.f32 %v597, 0.0
    %vm599 = vcmp.gt.f32.partialorder %v566, 0.0
    %v600 = vsel %vm599, 1, 0
    %vm601 = vcmp.eq.s32.totalorder %v600, 1
    %v602 = vsel %vm601, %v570, -1e+30
    %v603 = vsel %vm179, %v602, -inf
    %v604 = vrot.slane %v603, 4
    %v605 = vmax.f32 %v603, %v604
    %v606 = vrot.slane %v605, 2
    %v607 = vmax.f32 %v605, %v606
    %v608 = vrot.slane %v607, 1
    %v609 = vmax.f32 %v607, %v608
    %v610 = vsel %vm179, %v570, 0.0
    %v611 = vrot.slane %v610, 4
    %v612 = vadd.f32 %v610, %v611
    %v613 = vrot.slane %v612, 2
    %v614 = vadd.f32 %v612, %v613
    %v615 = vrot.slane %v614, 1
    %v616 = vadd.f32 %v614, %v615
    %v617 = vmul.f32 %v616, 0.25
    %vm618 = vcmp.eq.s32.totalorder %v572, 1
    %v619 = vsel %vm618, 1, 0
    %v620 = vcvt.s32.f32 %v619
    %v621 = vmul.f32 %v620, %v609
    %v622 = vadd.f32 %v596, %v621
    %v623 = vmul.f32 %v620, %v617
    %v624 = vadd.f32 %v598, %v623
    %v625 = vld [vmem:[#allocation7 + $0x68] sm:$0xff]
    %v626 = vld [vmem:[#allocation7 + $0x70] sm:$0xff]
    %v627 = vld [vmem:[#allocation7 + $0x78] sm:$0xff]
    %v628 = vld [vmem:[#allocation7 + $0x80] sm:$0xff]
    %v629 = vld [vmem:[#allocation7 + $0x88] sm:$0xff]
    %v630 = vld [vmem:[#allocation7 + $0x90] sm:$0xff]
    %v631 = vld [vmem:[#allocation7 + $0x98] sm:$0xff]
    %v632 = vld [vmem:[#allocation7 + $0xa0] sm:$0xff]
    %v633 = vld [vmem:[#allocation7 + $0xa8] sm:$0x1]
    %634 = vmatprep.subr.mxu0 0.0
    %635 = vmatpush1.msra.mxu0 %v569
    %636 = vmatprep.subr.mxu0 0.0
    %637 = vmatpush1.msra.mxu0 %v570
    %638 = vmatprep.subr.mxu0 0.0
    %639 = vmatpush1.msra.mxu0 0.0
    %640 = vmatprep.subr.mxu0 0.0
    %641 = vmatpush1.msra.mxu0 0.0
    %642 = vmatprep.subr.mxu0 0.0
    %643 = vmatpush1.msra.mxu0 0.0
    %644 = vmatprep.subr.mxu0 0.0
    %645 = vmatpush1.msra.mxu0 0.0
    %646 = vmatprep.subr.mxu0 0.0
    %647 = vmatpush1.msra.mxu0 0.0
    %648 = vmatprep.subr.mxu0 0.0
    %649 = vmatpush1.msra.mxu0 0.0
    %650 = vmatprep.subr.mxu0 0.0
    %651 = vmatpush1.msra.mxu0 0.0
    %652 = vmatprep.subr.mxu0 0.0
    %653 = vmatpush1.msra.mxu0 0.0
    %654 = vmatprep.subr.mxu0 0.0
    %655 = vmatpush1.msra.mxu0 0.0
    %656 = vmatprep.subr.mxu0 0.0
    %657 = vmatpush1.msra.mxu0 0.0
    %658 = vmatprep.subr.mxu0 0.0
    %659 = vmatpush1.msra.mxu0 0.0
    %660 = vmatprep.subr.mxu0 0.0
    %661 = vmatpush1.msra.mxu0 0.0
    %662 = vmatprep.subr.mxu0 0.0
    %663 = vmatpush1.msra.mxu0 0.0
    %664 = vmatprep.subr.mxu0 0.0
    %665 = vmatpush1.msra.mxu0 0.0
    %666 = vmatprep.subr.mxu0 0.0
    %667 = vmatpush1.msra.mxu0 0.0
    %668 = vmatprep.subr.mxu0 0.0
    %669 = vmatpush1.msra.mxu0 0.0
    %670 = vmatprep.subr.mxu0 0.0
    %671 = vmatpush1.msra.mxu0 0.0
    %672 = vmatprep.subr.mxu0 0.0
    %673 = vmatpush1.msra.mxu0 0.0
    %674 = vmatprep.subr.mxu0 0.0
    %675 = vmatpush1.msra.mxu0 0.0
    %676 = vmatprep.subr.mxu0 0.0
    %677 = vmatpush1.msra.mxu0 0.0
    %678 = vmatprep.subr.mxu0 0.0
    %679 = vmatpush1.msra.mxu0 0.0
    %680 = vmatprep.subr.mxu0 0.0
    %681 = vmatpush1.msra.mxu0 0.0
    %682 = vmatprep.subr.mxu0 0.0
    %683 = vmatpush1.msra.mxu0 0.0
    %684 = vmatprep.subr.mxu0 0.0
    %685 = vmatpush1.msra.mxu0 0.0
    %686 = vmatprep.subr.mxu0 0.0
    %687 = vmatpush1.msra.mxu0 0.0
    %688 = vmatprep.subr.mxu0 0.0
    %689 = vmatpush1.msra.mxu0 0.0
    %690 = vmatprep.subr.mxu0 0.0
    %691 = vmatpush1.msra.mxu0 0.0
    %692 = vmatprep.subr.mxu0 0.0
    %693 = vmatpush1.msra.mxu0 0.0
    %694 = vmatprep.subr.mxu0 0.0
    %695 = vmatpush1.msra.mxu0 0.0
    %696 = vmatprep.subr.mxu0 0.0
    %697 = vmatpush1.msra.mxu0 0.0
    %698 = vmatprep.mubr.f32.mxu0 0.0
    %699 = vmatmul.mubr.f32.gmra.mrb[0].mxu0 %v91
    %v700 = vpop.f32.mrb[0].mxu0
    %v701 = vadd.f32 0.0, %v700
    %v702 = vpop.f32.mrb[0].mxu0
    %703 = vmatprep.mubr.f32.mxu0 0.0
    %704 = vmatmul.mubr.f32.gmra.mrb[0].mxu0 %v94
    %v705 = vpop.f32.mrb[0].mxu0
    %v706 = vadd.f32 0.0, %v705
    %v707 = vpop.f32.mrb[0].mxu0
    %708 = vdwg.mxu0
    %v709 = vmul.f32 %v569, 101.0
    %v710 = vmul.f32 %v570, 101.0
    %v711 = vadd.f32 %v709, %v701
    %v712 = vadd.f32 %v710, %v706
    %v713 = vlaneseq
    %v714 = vshrl.u32 %v713, 7
    %v715 = vsub.s32 0, %v714
    %v716 = vrot.slane %v633, %v715
    %v718 = vsel %vm179, %v711, 0
    %v721 = vsel %vm179, %v712, 0
    %723 = vmatprep.subr.mxu0 0.0
    %724 = vmatpush1.msra.mxu0 %v625
    %725 = vmatprep.subr.mxu0 0.0
    %726 = vmatpush1.msra.mxu0 %v626
    %727 = vmatprep.subr.mxu0 0.0
    %728 = vmatpush1.msra.mxu0 %v627
    %729 = vmatprep.subr.mxu0 0.0
    %730 = vmatpush1.msra.mxu0 %v628
    %731 = vmatprep.subr.mxu0 0.0
    %732 = vmatpush1.msra.mxu0 %v629
    %733 = vmatprep.subr.mxu0 0.0
    %734 = vmatpush1.msra.mxu0 %v630
    %735 = vmatprep.subr.mxu0 0.0
    %736 = vmatpush1.msra.mxu0 %v631
    %737 = vmatprep.subr.mxu0 0.0
    %738 = vmatpush1.msra.mxu0 %v632
    %739 = vmatprep.subr.mxu0 0.0
    %740 = vmatpush1.msra.mxu0 0.0
    %741 = vmatprep.subr.mxu0 0.0
    %742 = vmatpush1.msra.mxu0 0.0
    %743 = vmatprep.subr.mxu0 0.0
    %744 = vmatpush1.msra.mxu0 0.0
    %745 = vmatprep.subr.mxu0 0.0
    %746 = vmatpush1.msra.mxu0 0.0
    %747 = vmatprep.subr.mxu0 0.0
    %748 = vmatpush1.msra.mxu0 0.0
    %749 = vmatprep.subr.mxu0 0.0
    %750 = vmatpush1.msra.mxu0 0.0
    %751 = vmatprep.subr.mxu0 0.0
    %752 = vmatpush1.msra.mxu0 0.0
    %753 = vmatprep.subr.mxu0 0.0
    %754 = vmatpush1.msra.mxu0 0.0
    %755 = vmatprep.subr.mxu0 0.0
    %756 = vmatpush1.msra.mxu0 0.0
    %757 = vmatprep.subr.mxu0 0.0
    %758 = vmatpush1.msra.mxu0 0.0
    %759 = vmatprep.subr.mxu0 0.0
    %760 = vmatpush1.msra.mxu0 0.0
    %761 = vmatprep.subr.mxu0 0.0
    %762 = vmatpush1.msra.mxu0 0.0
    %763 = vmatprep.subr.mxu0 0.0
    %764 = vmatpush1.msra.mxu0 0.0
    %765 = vmatprep.subr.mxu0 0.0
    %766 = vmatpush1.msra.mxu0 0.0
    %767 = vmatprep.subr.mxu0 0.0
    %768 = vmatpush1.msra.mxu0 0.0
    %769 = vmatprep.subr.mxu0 0.0
    %770 = vmatpush1.msra.mxu0 0.0
    %771 = vmatprep.subr.mxu0 0.0
    %772 = vmatpush1.msra.mxu0 0.0
    %773 = vmatprep.subr.mxu0 0.0
    %774 = vmatpush1.msra.mxu0 0.0
    %775 = vmatprep.subr.mxu0 0.0
    %776 = vmatpush1.msra.mxu0 0.0
    %777 = vmatprep.subr.mxu0 0.0
    %778 = vmatpush1.msra.mxu0 0.0
    %779 = vmatprep.subr.mxu0 0.0
    %780 = vmatpush1.msra.mxu0 0.0
    %781 = vmatprep.subr.mxu0 0.0
    %782 = vmatpush1.msra.mxu0 0.0
    %783 = vmatprep.subr.mxu0 0.0
    %784 = vmatpush1.msra.mxu0 0.0
    %785 = vmatprep.subr.mxu0 0.0
    %786 = vmatpush1.msra.mxu0 0.0
    %787 = vmatprep.mubr.f32.mxu0 0.0
    %788 = vmatmul.mubr.f32.gmra.mrb[0].mxu0 %v718
    %v789 = vpop.f32.mrb[0].mxu0
    %v790 = vadd.f32 %v716, %v789
    %v791 = vpop.f32.mrb[0].mxu0
    %792 = vmatprep.mubr.f32.mxu0 0.0
    %793 = vmatmul.mubr.f32.gmra.mrb[0].mxu0 %v721
    %v794 = vpop.f32.mrb[0].mxu0
    %v795 = vadd.f32 %v716, %v794
    %v796 = vpop.f32.mrb[0].mxu0
    %797 = vdwg.mxu0
    %v798 = vmax.f32 %v790, 0.0
    %v799 = vmax.f32 %v795, 0.0
    %v800 = vld [vmem:[#allocation7 + $0xb0] sm:$0xff]
    %v801 = vld [vmem:[#allocation7 + $0xb8] sm:$0x1]
    %v802 = vlaneseq
    %v803 = vshrl.u32 %v802, 7
    %v804 = vsub.s32 0, %v803
    %v805 = vrot.slane %v801, %v804
    %v807 = vsel %vm269, %v798, 0
    %v810 = vsel %vm269, %v799, 0
    %812 = vmatprep.subr.mxu0 0.0
    %813 = vmatpush1.msra.mxu0 %v800
    %814 = vmatprep.subr.mxu0 0.0
    %815 = vmatpush1.msra.mxu0 0.0
    %816 = vmatprep.subr.mxu0 0.0
    %817 = vmatpush1.msra.mxu0 0.0
    %818 = vmatprep.subr.mxu0 0.0
    %819 = vmatpush1.msra.mxu0 0.0
    %820 = vmatprep.subr.mxu0 0.0
    %821 = vmatpush1.msra.mxu0 0.0
    %822 = vmatprep.subr.mxu0 0.0
    %823 = vmatpush1.msra.mxu0 0.0
    %824 = vmatprep.subr.mxu0 0.0
    %825 = vmatpush1.msra.mxu0 0.0
    %826 = vmatprep.subr.mxu0 0.0
    %827 = vmatpush1.msra.mxu0 0.0
    %828 = vmatprep.subr.mxu0 0.0
    %829 = vmatpush1.msra.mxu0 0.0
    %830 = vmatprep.subr.mxu0 0.0
    %831 = vmatpush1.msra.mxu0 0.0
    %832 = vmatprep.subr.mxu0 0.0
    %833 = vmatpush1.msra.mxu0 0.0
    %834 = vmatprep.subr.mxu0 0.0
    %835 = vmatpush1.msra.mxu0 0.0
    %836 = vmatprep.subr.mxu0 0.0
    %837 = vmatpush1.msra.mxu0 0.0
    %838 = vmatprep.subr.mxu0 0.0
    %839 = vmatpush1.msra.mxu0 0.0
    %840 = vmatprep.subr.mxu0 0.0
    %841 = vmatpush1.msra.mxu0 0.0
    %842 = vmatprep.subr.mxu0 0.0
    %843 = vmatpush1.msra.mxu0 0.0
    %844 = vmatprep.subr.mxu0 0.0
    %845 = vmatpush1.msra.mxu0 0.0
    %846 = vmatprep.subr.mxu0 0.0
    %847 = vmatpush1.msra.mxu0 0.0
    %848 = vmatprep.subr.mxu0 0.0
    %849 = vmatpush1.msra.mxu0 0.0
    %850 = vmatprep.subr.mxu0 0.0
    %851 = vmatpush1.msra.mxu0 0.0
    %852 = vmatprep.subr.mxu0 0.0
    %853 = vmatpush1.msra.mxu0 0.0
    %854 = vmatprep.subr.mxu0 0.0
    %855 = vmatpush1.msra.mxu0 0.0
    %856 = vmatprep.subr.mxu0 0.0
    %857 = vmatpush1.msra.mxu0 0.0
    %858 = vmatprep.subr.mxu0 0.0
    %859 = vmatpush1.msra.mxu0 0.0
    %860 = vmatprep.subr.mxu0 0.0
    %861 = vmatpush1.msra.mxu0 0.0
    %862 = vmatprep.subr.mxu0 0.0
    %863 = vmatpush1.msra.mxu0 0.0
    %864 = vmatprep.subr.mxu0 0.0
    %865 = vmatpush1.msra.mxu0 0.0
    %866 = vmatprep.subr.mxu0 0.0
    %867 = vmatpush1.msra.mxu0 0.0
    %868 = vmatprep.subr.mxu0 0.0
    %869 = vmatpush1.msra.mxu0 0.0
    %870 = vmatprep.subr.mxu0 0.0
    %871 = vmatpush1.msra.mxu0 0.0
    %872 = vmatprep.subr.mxu0 0.0
    %873 = vmatpush1.msra.mxu0 0.0
    %874 = vmatprep.subr.mxu0 0.0
    %875 = vmatpush1.msra.mxu0 0.0
    %876 = vmatprep.mubr.f32.mxu0 0.0
    %877 = vmatmul.mubr.f32.gmra.mrb[0].mxu0 %v807
    %v878 = vpop.f32.mrb[0].mxu0
    %v879 = vadd.f32 %v805, %v878
    %v880 = vpop.f32.mrb[0].mxu0
    %881 = vmatprep.mubr.f32.mxu0 0.0
    %882 = vmatmul.mubr.f32.gmra.mrb[0].mxu0 %v810
    %v883 = vpop.f32.mrb[0].mxu0
    %v884 = vadd.f32 %v805, %v883
    %v885 = vpop.f32.mrb[0].mxu0
    %886 = vdwg.mxu0
    %v887 = vld [vmem:[#allocation7 + $0xc0] sm:$0xff]
    %v888 = vld [vmem:[#allocation7 + $0xc8] sm:$0x1]
    %v889 = vlaneseq
    %v890 = vshrl.u32 %v889, 7
    %v891 = vsub.s32 0, %v890
    %v892 = vrot.slane %v888, %v891
    %893 = vmatprep.subr.mxu0 0.0
    %894 = vmatpush1.msra.mxu0 %v887
    %895 = vmatprep.subr.mxu0 0.0
    %896 = vmatpush1.msra.mxu0 0.0
    %897 = vmatprep.subr.mxu0 0.0
    %898 = vmatpush1.msra.mxu0 0.0
    %899 = vmatprep.subr.mxu0 0.0
    %900 = vmatpush1.msra.mxu0 0.0
    %901 = vmatprep.subr.mxu0 0.0
    %902 = vmatpush1.msra.mxu0 0.0
    %903 = vmatprep.subr.mxu0 0.0
    %904 = vmatpush1.msra.mxu0 0.0
    %905 = vmatprep.subr.mxu0 0.0
    %906 = vmatpush1.msra.mxu0 0.0
    %907 = vmatprep.subr.mxu0 0.0
    %908 = vmatpush1.msra.mxu0 0.0
    %909 = vmatprep.subr.mxu0 0.0
    %910 = vmatpush1.msra.mxu0 0.0
    %911 = vmatprep.subr.mxu0 0.0
    %912 = vmatpush1.msra.mxu0 0.0
    %913 = vmatprep.subr.mxu0 0.0
    %914 = vmatpush1.msra.mxu0 0.0
    %915 = vmatprep.subr.mxu0 0.0
    %916 = vmatpush1.msra.mxu0 0.0
    %917 = vmatprep.subr.mxu0 0.0
    %918 = vmatpush1.msra.mxu0 0.0
    %919 = vmatprep.subr.mxu0 0.0
    %920 = vmatpush1.msra.mxu0 0.0
    %921 = vmatprep.subr.mxu0 0.0
    %922 = vmatpush1.msra.mxu0 0.0
    %923 = vmatprep.subr.mxu0 0.0
    %924 = vmatpush1.msra.mxu0 0.0
    %925 = vmatprep.subr.mxu0 0.0
    %926 = vmatpush1.msra.mxu0 0.0
    %927 = vmatprep.subr.mxu0 0.0
    %928 = vmatpush1.msra.mxu0 0.0
    %929 = vmatprep.subr.mxu0 0.0
    %930 = vmatpush1.msra.mxu0 0.0
    %931 = vmatprep.subr.mxu0 0.0
    %932 = vmatpush1.msra.mxu0 0.0
    %933 = vmatprep.subr.mxu0 0.0
    %934 = vmatpush1.msra.mxu0 0.0
    %935 = vmatprep.subr.mxu0 0.0
    %936 = vmatpush1.msra.mxu0 0.0
    %937 = vmatprep.subr.mxu0 0.0
    %938 = vmatpush1.msra.mxu0 0.0
    %939 = vmatprep.subr.mxu0 0.0
    %940 = vmatpush1.msra.mxu0 0.0
    %941 = vmatprep.subr.mxu0 0.0
    %942 = vmatpush1.msra.mxu0 0.0
    %943 = vmatprep.subr.mxu0 0.0
    %944 = vmatpush1.msra.mxu0 0.0
    %945 = vmatprep.subr.mxu0 0.0
    %946 = vmatpush1.msra.mxu0 0.0
    %947 = vmatprep.subr.mxu0 0.0
    %948 = vmatpush1.msra.mxu0 0.0
    %949 = vmatprep.subr.mxu0 0.0
    %950 = vmatpush1.msra.mxu0 0.0
    %951 = vmatprep.subr.mxu0 0.0
    %952 = vmatpush1.msra.mxu0 0.0
    %953 = vmatprep.subr.mxu0 0.0
    %954 = vmatpush1.msra.mxu0 0.0
    %955 = vmatprep.subr.mxu0 0.0
    %956 = vmatpush1.msra.mxu0 0.0
    %957 = vmatprep.mubr.f32.mxu0 0.0
    %958 = vmatmul.mubr.f32.gmra.mrb[0].mxu0 %v807
    %v959 = vpop.f32.mrb[0].mxu0
    %v960 = vadd.f32 %v892, %v959
    %v961 = vpop.f32.mrb[0].mxu0
    %962 = vmatprep.mubr.f32.mxu0 0.0
    %963 = vmatmul.mubr.f32.gmra.mrb[0].mxu0 %v810
    %v964 = vpop.f32.mrb[0].mxu0
    %v965 = vadd.f32 %v892, %v964
    %v966 = vpop.f32.mrb[0].mxu0
    %967 = vdwg.mxu0
    %v968 = vsub.f32 0.0, %v960
    %v969 = vsub.f32 0.0, %v965
    %v970 = vmul.f32 %v968, 1.442695
    %v971 = vpow.pop %v970
    %v972 = vmul.f32 %v969, 1.442695
    %v973 = vpow.pop %v972
    %v974 = vadd.f32 %v971, 1.0
    %v975 = vadd.f32 %v973, 1.0
    %v976 = vrcp.pop %v974
    %v977 = vmul.f32 1.0, %v976
    %v978 = vrcp.pop %v975
    %v979 = vmul.f32 1.0, %v978
    %vm980 = vcmp.gt.f32.partialorder %v565, 0.5
    %vm981 = vcmp.gt.f32.partialorder %v566, 0.5
    %v982 = vsel %vm980, %v977, -1.0
    %v983 = vsel %vm981, %v979, -1.0
    %985 = vset.pattern.permute.xlu0 0
    %986 = vperm.xlu0 %985, %v982
    %v987 = vpop.permute.xlu0 %986
    %990 = vset.pattern.permute.xlu0 0
    %991 = vperm.xlu0 %990, %v983
    %v992 = vpop.permute.xlu0 %991
    %v994 = vsel %vm454, %v982, 0
    %v996 = vsel %vm454, %v983, 0
    %998 = vmatprep.subr.mxu0 0.0
    %999 = vmatpush1.xpose.msra.mxu0 %v994
    %1000 = vmatprep.subr.mxu0 0.0
    %1001 = vmatpush1.xpose.msra.mxu0 %v996
    %1002 = vmatprep.subr.mxu0 0.0
    %1003 = vmatpush1.xpose.msra.mxu0 0.0
    %1004 = vmatprep.subr.mxu0 0.0
    %1005 = vmatpush1.xpose.msra.mxu0 0.0
    %1006 = vmatprep.subr.mxu0 0.0
    %1007 = vmatpush1.xpose.msra.mxu0 0.0
    %1008 = vmatprep.subr.mxu0 0.0
    %1009 = vmatpush1.xpose.msra.mxu0 0.0
    %1010 = vmatprep.subr.mxu0 0.0
    %1011 = vmatpush1.xpose.msra.mxu0 0.0
    %1012 = vmatprep.subr.mxu0 0.0
    %1013 = vmatpush1.xpose.msra.mxu0 0.0
    %1014 = vmatprep.subr.mxu0 0.0
    %1015 = vmatpush1.xpose.msra.mxu0 0.0
    %1016 = vmatprep.subr.mxu0 0.0
    %1017 = vmatpush1.xpose.msra.mxu0 0.0
    %1018 = vmatprep.subr.mxu0 0.0
    %1019 = vmatpush1.xpose.msra.mxu0 0.0
    %1020 = vmatprep.subr.mxu0 0.0
    %1021 = vmatpush1.xpose.msra.mxu0 0.0
    %1022 = vmatprep.subr.mxu0 0.0
    %1023 = vmatpush1.xpose.msra.mxu0 0.0
    %1024 = vmatprep.subr.mxu0 0.0
    %1025 = vmatpush1.xpose.msra.mxu0 0.0
    %1026 = vmatprep.subr.mxu0 0.0
    %1027 = vmatpush1.xpose.msra.mxu0 0.0
    %1028 = vmatprep.subr.mxu0 0.0
    %1029 = vmatpush1.xpose.msra.mxu0 0.0
    %1030 = vmatprep.subr.mxu0 0.0
    %1031 = vmatpush1.xpose.msra.mxu0 0.0
    %1032 = vmatprep.subr.mxu0 0.0
    %1033 = vmatpush1.xpose.msra.mxu0 0.0
    %1034 = vmatprep.subr.mxu0 0.0
    %1035 = vmatpush1.xpose.msra.mxu0 0.0
    %1036 = vmatprep.subr.mxu0 0.0
    %1037 = vmatpush1.xpose.msra.mxu0 0.0
    %1038 = vmatprep.subr.mxu0 0.0
    %1039 = vmatpush1.xpose.msra.mxu0 0.0
    %1040 = vmatprep.subr.mxu0 0.0
    %1041 = vmatpush1.xpose.msra.mxu0 0.0
    %1042 = vmatprep.subr.mxu0 0.0
    %1043 = vmatpush1.xpose.msra.mxu0 0.0
    %1044 = vmatprep.subr.mxu0 0.0
    %1045 = vmatpush1.xpose.msra.mxu0 0.0
    %1046 = vmatprep.subr.mxu0 0.0
    %1047 = vmatpush1.xpose.msra.mxu0 0.0
    %1048 = vmatprep.subr.mxu0 0.0
    %1049 = vmatpush1.xpose.msra.mxu0 0.0
    %1050 = vmatprep.subr.mxu0 0.0
    %1051 = vmatpush1.xpose.msra.mxu0 0.0
    %1052 = vmatprep.subr.mxu0 0.0
    %1053 = vmatpush1.xpose.msra.mxu0 0.0
    %1054 = vmatprep.subr.mxu0 0.0
    %1055 = vmatpush1.xpose.msra.mxu0 0.0
    %1056 = vmatprep.subr.mxu0 0.0
    %1057 = vmatpush1.xpose.msra.mxu0 0.0
    %1058 = vmatprep.subr.mxu0 0.0
    %1059 = vmatpush1.xpose.msra.mxu0 0.0
    %1060 = vmatprep.subr.mxu0 0.0
    %1061 = vmatpush1.xpose.msra.mxu0 0.0
    %1062 = vmatprep.mubr.f32.mxu0 0.0
    %1063 = vmatmul.mubr.f32.gmra.mrb[0].mxu0 %v456
    %v1064 = vpop.f32.mrb[0].mxu0
    %v1065 = vadd.f32 0.0, %v1064
    %v1066 = vpop.f32.mrb[0].mxu0
    %1067 = vmatprep.mubr.f32.mxu0 0.0
    %1068 = vmatmul.mubr.f32.gmra.mrb[0].mxu0 %v456
    %v1069 = vpop.f32.mrb[0].mxu0
    %v1070 = vadd.f32 0.0, %v1069
    %v1071 = vpop.f32.mrb[0].mxu0
    %1072 = vdwg.mxu0
    %vm1073 = vcmp.gt.f32.partialorder %v1065, %v987
    %vm1074 = vcmp.gt.f32.partialorder %v1070, %v992
    %v1075 = vsel %vm1073, 1, 0
    %v1076 = vsel %vm1074, 1, 0
    %v1077 = vcvt.s32.f32 %v1075
    %v1078 = vcvt.s32.f32 %v1076
    %vm1079 = vcmp.eq.f32.partialorder %v1065, %v987
    %vm1080 = vcmp.eq.f32.partialorder %v1070, %v992
    %v1081 = vsel %vm1079, 1, 0
    %v1082 = vsel %vm1080, 1, 0
    %v1083 = vcvt.s32.f32 %v1081
    %v1084 = vcvt.s32.f32 %v1082
    %v1085 = vmul.f32 %v76, %v1077
    %v1086 = vmul.f32 %v77, %v1078
    %v1087 = vmul.f32 %v78, %v1083
    %v1088 = vmul.f32 %v79, %v1084
    %v1089 = vadd.f32 %v1085, %v1087
    %v1090 = vadd.f32 %v1086, %v1088
    %v1091 = vsel %vm89, %v1089, 0.0
    %1092 = vadd.xlane.f32.xlu0 %v1091
    %v1093 = vpop.xlane.xlu0 %1092
    %v1094 = vsel %vm89, %v1090, 0.0
    %1095 = vadd.xlane.f32.xlu0 %v1094
    %v1096 = vpop.xlane.xlu0 %1095
    %vm1097 = vcmp.lt.f32.partialorder %v1093, 2.0
    %vm1098 = vcmp.lt.f32.partialorder %v1096, 2.0
    %v1099 = vsel %vm1097, 1, 0
    %v1100 = vsel %vm1098, 1, 0
    %v1101 = vcvt.s32.f32 %v1099
    %v1102 = vcvt.s32.f32 %v1100
    %v1103 = vmul.f32 %v1101, %v565
    %v1104 = vmul.f32 %v1102, %v566
    %1106 = vset.pattern.permute.xlu0 0
    %1107 = vperm.xlu0 %1106, %v977
    %v1108 = vpop.permute.xlu0 %1107
    %1111 = vset.pattern.permute.xlu0 0
    %1112 = vperm.xlu0 %1111, %v979
    %v1113 = vpop.permute.xlu0 %1112
    %v1115 = vmul.f32 %v879, %v1108
    %v1116 = vmul.f32 %v884, %v1113
    %v1117 = vmul.f32 %v1115, %v1103
    %v1118 = vmul.f32 %v1116, %v1104
    %vm1119 = vcmp.gt.f32.partialorder %v1103, 0.0
    %v1120 = vsel %vm1119, 1, 0
    %vm1121 = vcmp.eq.s32.totalorder %v1120, 1
    %v1122 = vsel %vm1121, %v1117, -1e+30
    %vm1123 = vcmask 818176
    %v1124 = vsel %vm1123, %v1122, -inf
    %v1125 = vrot.slane %v1124, 4
    %v1126 = vmax.f32 %v1124, %v1125
    %v1127 = vrot.slane %v1126, 2
    %v1128 = vmax.f32 %v1126, %v1127
    %v1129 = vrot.slane %v1128, 1
    %v1130 = vmax.f32 %v1128, %v1129
    %v1131 = vsel %vm1123, %v1117, 0.0
    %v1132 = vrot.slane %v1131, 4
    %v1133 = vadd.f32 %v1131, %v1132
    %v1134 = vrot.slane %v1133, 2
    %v1135 = vadd.f32 %v1133, %v1134
    %v1136 = vrot.slane %v1135, 1
    %v1137 = vadd.f32 %v1135, %v1136
    %v1138 = vmul.f32 %v1137, 0.5
    %v1139 = vmul.f32 %v594, %v1130
    %v1140 = vadd.f32 %v1139, 0.0
    %v1141 = vmul.f32 %v594, %v1138
    %v1142 = vadd.f32 %v1141, 0.0
    %vm1143 = vcmp.gt.f32.partialorder %v1104, 0.0
    %v1144 = vsel %vm1143, 1, 0
    %vm1145 = vcmp.eq.s32.totalorder %v1144, 1
    %v1146 = vsel %vm1145, %v1118, -1e+30
    %v1147 = vsel %vm1123, %v1146, -inf
    %v1148 = vrot.slane %v1147, 4
    %v1149 = vmax.f32 %v1147, %v1148
    %v1150 = vrot.slane %v1149, 2
    %v1151 = vmax.f32 %v1149, %v1150
    %v1152 = vrot.slane %v1151, 1
    %v1153 = vmax.f32 %v1151, %v1152
    %v1154 = vsel %vm1123, %v1118, 0.0
    %v1155 = vrot.slane %v1154, 4
    %v1156 = vadd.f32 %v1154, %v1155
    %v1157 = vrot.slane %v1156, 2
    %v1158 = vadd.f32 %v1156, %v1157
    %v1159 = vrot.slane %v1158, 1
    %v1160 = vadd.f32 %v1158, %v1159
    %v1161 = vmul.f32 %v1160, 0.5
    %v1162 = vmul.f32 %v620, %v1153
    %v1163 = vadd.f32 %v1140, %v1162
    %v1164 = vmul.f32 %v620, %v1161
    %v1165 = vadd.f32 %v1142, %v1164
    %v1166 = vld [vmem:[#allocation7 + $0xd0] sm:$0xff]
    %v1167 = vld [vmem:[#allocation7 + $0xd8] sm:$0xff]
    %v1168 = vld [vmem:[#allocation7 + $0xe0] sm:$0xff]
    %v1169 = vld [vmem:[#allocation7 + $0xe8] sm:$0xff]
    %v1170 = vld [vmem:[#allocation7 + $0xf0] sm:$0xff]
    %v1171 = vld [vmem:[#allocation7 + $0xf8] sm:$0xff]
    %v1172 = vld [vmem:[#allocation7 + $0x100] sm:$0xff]
    %v1173 = vld [vmem:[#allocation7 + $0x108] sm:$0xff]
    %v1174 = vld [vmem:[#allocation7 + $0x110] sm:$0xff]
    %v1175 = vld [vmem:[#allocation7 + $0x118] sm:$0xff]
    %v1176 = vld [vmem:[#allocation7 + $0x120] sm:$0xff]
    %v1177 = vld [vmem:[#allocation7 + $0x128] sm:$0xff]
    %v1178 = vld [vmem:[#allocation7 + $0x130] sm:$0xff]
    %v1179 = vld [vmem:[#allocation7 + $0x138] sm:$0xff]
    %v1180 = vld [vmem:[#allocation7 + $0x140] sm:$0xff]
    %v1181 = vld [vmem:[#allocation7 + $0x148] sm:$0xff]
    %v1183 = vsel %vm179, %v624, 0
    %1185 = vmatprep.subr.mxu0 0.0
    %1186 = vmatpush1.msra.mxu0 %v1174
    %1187 = vmatprep.subr.mxu0 0.0
    %1188 = vmatpush1.msra.mxu0 %v1175
    %1189 = vmatprep.subr.mxu0 0.0
    %1190 = vmatpush1.msra.mxu0 %v1176
    %1191 = vmatprep.subr.mxu0 0.0
    %1192 = vmatpush1.msra.mxu0 %v1177
    %1193 = vmatprep.subr.mxu0 0.0
    %1194 = vmatpush1.msra.mxu0 %v1178
    %1195 = vmatprep.subr.mxu0 0.0
    %1196 = vmatpush1.msra.mxu0 %v1179
    %1197 = vmatprep.subr.mxu0 0.0
    %1198 = vmatpush1.msra.mxu0 %v1180
    %1199 = vmatprep.subr.mxu0 0.0
    %1200 = vmatpush1.msra.mxu0 %v1181
    %1201 = vmatprep.subr.mxu0 0.0
    %1202 = vmatpush1.msra.mxu0 0.0
    %1203 = vmatprep.subr.mxu0 0.0
    %1204 = vmatpush1.msra.mxu0 0.0
    %1205 = vmatprep.subr.mxu0 0.0
    %1206 = vmatpush1.msra.mxu0 0.0
    %1207 = vmatprep.subr.mxu0 0.0
    %1208 = vmatpush1.msra.mxu0 0.0
    %1209 = vmatprep.subr.mxu0 0.0
    %1210 = vmatpush1.msra.mxu0 0.0
    %1211 = vmatprep.subr.mxu0 0.0
    %1212 = vmatpush1.msra.mxu0 0.0
    %1213 = vmatprep.subr.mxu0 0.0
    %1214 = vmatpush1.msra.mxu0 0.0
    %1215 = vmatprep.subr.mxu0 0.0
    %1216 = vmatpush1.msra.mxu0 0.0
    %1217 = vmatprep.subr.mxu0 0.0
    %1218 = vmatpush1.msra.mxu0 0.0
    %1219 = vmatprep.subr.mxu0 0.0
    %1220 = vmatpush1.msra.mxu0 0.0
    %1221 = vmatprep.subr.mxu0 0.0
    %1222 = vmatpush1.msra.mxu0 0.0
    %1223 = vmatprep.subr.mxu0 0.0
    %1224 = vmatpush1.msra.mxu0 0.0
    %1225 = vmatprep.subr.mxu0 0.0
    %1226 = vmatpush1.msra.mxu0 0.0
    %1227 = vmatprep.subr.mxu0 0.0
    %1228 = vmatpush1.msra.mxu0 0.0
    %1229 = vmatprep.subr.mxu0 0.0
    %1230 = vmatpush1.msra.mxu0 0.0
    %1231 = vmatprep.subr.mxu0 0.0
    %1232 = vmatpush1.msra.mxu0 0.0
    %1233 = vmatprep.subr.mxu0 0.0
    %1234 = vmatpush1.msra.mxu0 0.0
    %1235 = vmatprep.subr.mxu0 0.0
    %1236 = vmatpush1.msra.mxu0 0.0
    %1237 = vmatprep.subr.mxu0 0.0
    %1238 = vmatpush1.msra.mxu0 0.0
    %1239 = vmatprep.subr.mxu0 0.0
    %1240 = vmatpush1.msra.mxu0 0.0
    %1241 = vmatprep.subr.mxu0 0.0
    %1242 = vmatpush1.msra.mxu0 0.0
    %1243 = vmatprep.subr.mxu0 0.0
    %1244 = vmatpush1.msra.mxu0 0.0
    %1245 = vmatprep.subr.mxu0 0.0
    %1246 = vmatpush1.msra.mxu0 0.0
    %1247 = vmatprep.subr.mxu0 0.0
    %1248 = vmatpush1.msra.mxu0 0.0
    %1249 = vmatprep.mubr.f32.mxu0 0.0
    %1250 = vmatmul.mubr.f32.gmra.mrb[0].mxu0 %v1183
    %v1251 = vpop.f32.mrb[0].mxu0
    %v1252 = vadd.f32 0.0, %v1251
    %v1253 = vpop.f32.mrb[0].mxu0
    %1254 = vdwg.mxu0
    %v1256 = vsel %vm179, %v622, 0
    %1258 = vmatprep.subr.mxu0 0.0
    %1259 = vmatpush1.msra.mxu0 %v1166
    %1260 = vmatprep.subr.mxu0 0.0
    %1261 = vmatpush1.msra.mxu0 %v1167
    %1262 = vmatprep.subr.mxu0 0.0
    %1263 = vmatpush1.msra.mxu0 %v1168
    %1264 = vmatprep.subr.mxu0 0.0
    %1265 = vmatpush1.msra.mxu0 %v1169
    %1266 = vmatprep.subr.mxu0 0.0
    %1267 = vmatpush1.msra.mxu0 %v1170
    %1268 = vmatprep.subr.mxu0 0.0
    %1269 = vmatpush1.msra.mxu0 %v1171
    %1270 = vmatprep.subr.mxu0 0.0
    %1271 = vmatpush1.msra.mxu0 %v1172
    %1272 = vmatprep.subr.mxu0 0.0
    %1273 = vmatpush1.msra.mxu0 %v1173
    %1274 = vmatprep.subr.mxu0 0.0
    %1275 = vmatpush1.msra.mxu0 0.0
    %1276 = vmatprep.subr.mxu0 0.0
    %1277 = vmatpush1.msra.mxu0 0.0
    %1278 = vmatprep.subr.mxu0 0.0
    %1279 = vmatpush1.msra.mxu0 0.0
    %1280 = vmatprep.subr.mxu0 0.0
    %1281 = vmatpush1.msra.mxu0 0.0
    %1282 = vmatprep.subr.mxu0 0.0
    %1283 = vmatpush1.msra.mxu0 0.0
    %1284 = vmatprep.subr.mxu0 0.0
    %1285 = vmatpush1.msra.mxu0 0.0
    %1286 = vmatprep.subr.mxu0 0.0
    %1287 = vmatpush1.msra.mxu0 0.0
    %1288 = vmatprep.subr.mxu0 0.0
    %1289 = vmatpush1.msra.mxu0 0.0
    %1290 = vmatprep.subr.mxu0 0.0
    %1291 = vmatpush1.msra.mxu0 0.0
    %1292 = vmatprep.subr.mxu0 0.0
    %1293 = vmatpush1.msra.mxu0 0.0
    %1294 = vmatprep.subr.mxu0 0.0
    %1295 = vmatpush1.msra.mxu0 0.0
    %1296 = vmatprep.subr.mxu0 0.0
    %1297 = vmatpush1.msra.mxu0 0.0
    %1298 = vmatprep.subr.mxu0 0.0
    %1299 = vmatpush1.msra.mxu0 0.0
    %1300 = vmatprep.subr.mxu0 0.0
    %1301 = vmatpush1.msra.mxu0 0.0
    %1302 = vmatprep.subr.mxu0 0.0
    %1303 = vmatpush1.msra.mxu0 0.0
    %1304 = vmatprep.subr.mxu0 0.0
    %1305 = vmatpush1.msra.mxu0 0.0
    %1306 = vmatprep.subr.mxu0 0.0
    %1307 = vmatpush1.msra.mxu0 0.0
    %1308 = vmatprep.subr.mxu0 0.0
    %1309 = vmatpush1.msra.mxu0 0.0
    %1310 = vmatprep.subr.mxu0 0.0
    %1311 = vmatpush1.msra.mxu0 0.0
    %1312 = vmatprep.subr.mxu0 0.0
    %1313 = vmatpush1.msra.mxu0 0.0
    %1314 = vmatprep.subr.mxu0 0.0
    %1315 = vmatpush1.msra.mxu0 0.0
    %1316 = vmatprep.subr.mxu0 0.0
    %1317 = vmatpush1.msra.mxu0 0.0
    %1318 = vmatprep.subr.mxu0 0.0
    %1319 = vmatpush1.msra.mxu0 0.0
    %1320 = vmatprep.subr.mxu0 0.0
    %1321 = vmatpush1.msra.mxu0 0.0
    %1322 = vmatprep.mubr.f32.mxu0 0.0
    %1323 = vmatmul.mubr.f32.gmra.mrb[0].mxu0 %v1256
    %v1324 = vpop.f32.mrb[0].mxu0
    %v1325 = vadd.f32 %v1252, %v1324
    %v1326 = vpop.f32.mrb[0].mxu0
    %1327 = vdwg.mxu0
    %v1328 = vld [vmem:[#allocation7 + $0x150] sm:$0xff]
    %v1329 = vld [vmem:[#allocation7 + $0x158] sm:$0xff]
    %v1330 = vld [vmem:[#allocation7 + $0x160] sm:$0xff]
    %v1331 = vld [vmem:[#allocation7 + $0x168] sm:$0xff]
    %v1332 = vld [vmem:[#allocation7 + $0x170] sm:$0xff]
    %v1333 = vld [vmem:[#allocation7 + $0x178] sm:$0xff]
    %v1334 = vld [vmem:[#allocation7 + $0x180] sm:$0xff]
    %v1335 = vld [vmem:[#allocation7 + $0x188] sm:$0xff]
    %v1336 = vld [vmem:[#allocation7 + $0x190] sm:$0xff]
    %v1337 = vld [vmem:[#allocation7 + $0x198] sm:$0xff]
    %v1338 = vld [vmem:[#allocation7 + $0x1a0] sm:$0xff]
    %v1339 = vld [vmem:[#allocation7 + $0x1a8] sm:$0xff]
    %v1340 = vld [vmem:[#allocation7 + $0x1b0] sm:$0xf]
    %v1342 = vsel %vm1123, %v1163, 0
    %vm1344 = vcmask 1043456
    %v1346 = vsel %vm1344, %v1340, 0
    %1348 = vmatprep.subr.mxu0 0.0
    %1349 = vmatpush1.msra.mxu0 %v1328
    %1350 = vmatprep.subr.mxu0 0.0
    %1351 = vmatpush1.msra.mxu0 %v1329
    %1352 = vmatprep.subr.mxu0 0.0
    %1353 = vmatpush1.msra.mxu0 %v1330
    %1354 = vmatprep.subr.mxu0 0.0
    %1355 = vmatpush1.msra.mxu0 %v1331
    %1356 = vmatprep.subr.mxu0 0.0
    %1357 = vmatpush1.msra.mxu0 %v1332
    %1358 = vmatprep.subr.mxu0 0.0
    %1359 = vmatpush1.msra.mxu0 %v1333
    %1360 = vmatprep.subr.mxu0 0.0
    %1361 = vmatpush1.msra.mxu0 %v1334
    %1362 = vmatprep.subr.mxu0 0.0
    %1363 = vmatpush1.msra.mxu0 %v1335
    %1364 = vmatprep.subr.mxu0 0.0
    %1365 = vmatpush1.msra.mxu0 %v1336
    %1366 = vmatprep.subr.mxu0 0.0
    %1367 = vmatpush1.msra.mxu0 %v1337
    %1368 = vmatprep.subr.mxu0 0.0
    %1369 = vmatpush1.msra.mxu0 %v1338
    %1370 = vmatprep.subr.mxu0 0.0
    %1371 = vmatpush1.msra.mxu0 %v1339
    %1372 = vmatprep.subr.mxu0 0.0
    %1373 = vmatpush1.msra.mxu0 %v1346
    %1374 = vmatprep.subr.mxu0 0.0
    %1375 = vmatpush1.msra.mxu0 0.0
    %1376 = vmatprep.subr.mxu0 0.0
    %1377 = vmatpush1.msra.mxu0 0.0
    %1378 = vmatprep.subr.mxu0 0.0
    %1379 = vmatpush1.msra.mxu0 0.0
    %1380 = vmatprep.subr.mxu0 0.0
    %1381 = vmatpush1.msra.mxu0 0.0
    %1382 = vmatprep.subr.mxu0 0.0
    %1383 = vmatpush1.msra.mxu0 0.0
    %1384 = vmatprep.subr.mxu0 0.0
    %1385 = vmatpush1.msra.mxu0 0.0
    %1386 = vmatprep.subr.mxu0 0.0
    %1387 = vmatpush1.msra.mxu0 0.0
    %1388 = vmatprep.subr.mxu0 0.0
    %1389 = vmatpush1.msra.mxu0 0.0
    %1390 = vmatprep.subr.mxu0 0.0
    %1391 = vmatpush1.msra.mxu0 0.0
    %1392 = vmatprep.subr.mxu0 0.0
    %1393 = vmatpush1.msra.mxu0 0.0
    %1394 = vmatprep.subr.mxu0 0.0
    %1395 = vmatpush1.msra.mxu0 0.0
    %1396 = vmatprep.subr.mxu0 0.0
    %1397 = vmatpush1.msra.mxu0 0.0
    %1398 = vmatprep.subr.mxu0 0.0
    %1399 = vmatpush1.msra.mxu0 0.0
    %1400 = vmatprep.subr.mxu0 0.0
    %1401 = vmatpush1.msra.mxu0 0.0
    %1402 = vmatprep.subr.mxu0 0.0
    %1403 = vmatpush1.msra.mxu0 0.0
    %1404 = vmatprep.subr.mxu0 0.0
    %1405 = vmatpush1.msra.mxu0 0.0
    %1406 = vmatprep.subr.mxu0 0.0
    %1407 = vmatpush1.msra.mxu0 0.0
    %1408 = vmatprep.subr.mxu0 0.0
    %1409 = vmatpush1.msra.mxu0 0.0
    %1410 = vmatprep.subr.mxu0 0.0
    %1411 = vmatpush1.msra.mxu0 0.0
    %1412 = vmatprep.mubr.f32.mxu0 0.0
    %1413 = vmatmul.mubr.f32.gmra.mrb[0].mxu0 %v1342
    %v1414 = vpop.f32.mrb[0].mxu0
    %v1415 = vadd.f32 0.0, %v1414
    %v1416 = vpop.f32.mrb[0].mxu0
    %1417 = vdwg.mxu0
    %v1418 = vadd.f32 %v1325, %v1415
    %v1419 = vld [vmem:[#allocation7 + $0x1b8] sm:$0xff]
    %v1420 = vld [vmem:[#allocation7 + $0x1c0] sm:$0xff]
    %v1421 = vld [vmem:[#allocation7 + $0x1c8] sm:$0xff]
    %v1422 = vld [vmem:[#allocation7 + $0x1d0] sm:$0xff]
    %v1423 = vld [vmem:[#allocation7 + $0x1d8] sm:$0xff]
    %v1424 = vld [vmem:[#allocation7 + $0x1e0] sm:$0xff]
    %v1425 = vld [vmem:[#allocation7 + $0x1e8] sm:$0xff]
    %v1426 = vld [vmem:[#allocation7 + $0x1f0] sm:$0xff]
    %v1427 = vld [vmem:[#allocation7 + $0x1f8] sm:$0xff]
    %v1428 = vld [vmem:[#allocation7 + $0x200] sm:$0xff]
    %v1429 = vld [vmem:[#allocation7 + $0x208] sm:$0xff]
    %v1430 = vld [vmem:[#allocation7 + $0x210] sm:$0xff]
    %v1431 = vld [vmem:[#allocation7 + $0x218] sm:$0xf]
    %v1433 = vsel %vm1123, %v1165, 0
    %v1436 = vsel %vm1344, %v1431, 0
    %1438 = vmatprep.subr.mxu0 0.0
    %1439 = vmatpush1.msra.mxu0 %v1419
    %1440 = vmatprep.subr.mxu0 0.0
    %1441 = vmatpush1.msra.mxu0 %v1420
    %1442 = vmatprep.subr.mxu0 0.0
    %1443 = vmatpush1.msra.mxu0 %v1421
    %1444 = vmatprep.subr.mxu0 0.0
    %1445 = vmatpush1.msra.mxu0 %v1422
    %1446 = vmatprep.subr.mxu0 0.0
    %1447 = vmatpush1.msra.mxu0 %v1423
    %1448 = vmatprep.subr.mxu0 0.0
    %1449 = vmatpush1.msra.mxu0 %v1424
    %1450 = vmatprep.subr.mxu0 0.0
    %1451 = vmatpush1.msra.mxu0 %v1425
    %1452 = vmatprep.subr.mxu0 0.0
    %1453 = vmatpush1.msra.mxu0 %v1426
    %1454 = vmatprep.subr.mxu0 0.0
    %1455 = vmatpush1.msra.mxu0 %v1427
    %1456 = vmatprep.subr.mxu0 0.0
    %1457 = vmatpush1.msra.mxu0 %v1428
    %1458 = vmatprep.subr.mxu0 0.0
    %1459 = vmatpush1.msra.mxu0 %v1429
    %1460 = vmatprep.subr.mxu0 0.0
    %1461 = vmatpush1.msra.mxu0 %v1430
    %1462 = vmatprep.subr.mxu0 0.0
    %1463 = vmatpush1.msra.mxu0 %v1436
    %1464 = vmatprep.subr.mxu0 0.0
    %1465 = vmatpush1.msra.mxu0 0.0
    %1466 = vmatprep.subr.mxu0 0.0
    %1467 = vmatpush1.msra.mxu0 0.0
    %1468 = vmatprep.subr.mxu0 0.0
    %1469 = vmatpush1.msra.mxu0 0.0
    %1470 = vmatprep.subr.mxu0 0.0
    %1471 = vmatpush1.msra.mxu0 0.0
    %1472 = vmatprep.subr.mxu0 0.0
    %1473 = vmatpush1.msra.mxu0 0.0
    %1474 = vmatprep.subr.mxu0 0.0
    %1475 = vmatpush1.msra.mxu0 0.0
    %1476 = vmatprep.subr.mxu0 0.0
    %1477 = vmatpush1.msra.mxu0 0.0
    %1478 = vmatprep.subr.mxu0 0.0
    %1479 = vmatpush1.msra.mxu0 0.0
    %1480 = vmatprep.subr.mxu0 0.0
    %1481 = vmatpush1.msra.mxu0 0.0
    %1482 = vmatprep.subr.mxu0 0.0
    %1483 = vmatpush1.msra.mxu0 0.0
    %1484 = vmatprep.subr.mxu0 0.0
    %1485 = vmatpush1.msra.mxu0 0.0
    %1486 = vmatprep.subr.mxu0 0.0
    %1487 = vmatpush1.msra.mxu0 0.0
    %1488 = vmatprep.subr.mxu0 0.0
    %1489 = vmatpush1.msra.mxu0 0.0
    %1490 = vmatprep.subr.mxu0 0.0
    %1491 = vmatpush1.msra.mxu0 0.0
    %1492 = vmatprep.subr.mxu0 0.0
    %1493 = vmatpush1.msra.mxu0 0.0
    %1494 = vmatprep.subr.mxu0 0.0
    %1495 = vmatpush1.msra.mxu0 0.0
    %1496 = vmatprep.subr.mxu0 0.0
    %1497 = vmatpush1.msra.mxu0 0.0
    %1498 = vmatprep.subr.mxu0 0.0
    %1499 = vmatpush1.msra.mxu0 0.0
    %1500 = vmatprep.subr.mxu0 0.0
    %1501 = vmatpush1.msra.mxu0 0.0
    %1502 = vmatprep.mubr.f32.mxu0 0.0
    %1503 = vmatmul.mubr.f32.gmra.mrb[0].mxu0 %v1433
    %v1504 = vpop.f32.mrb[0].mxu0
    %v1505 = vadd.f32 0.0, %v1504
    %v1506 = vpop.f32.mrb[0].mxu0
    %1507 = vdwg.mxu0
    %v1508 = vadd.f32 %v1418, %v1505
    %v1509 = vld [vmem:[#allocation7 + $0x220] sm:$0x1]
    %v1510 = vlaneseq
    %v1511 = vshrl.u32 %v1510, 7
    %v1512 = vsub.s32 0, %v1511
    %v1513 = vrot.slane %v1509, %v1512
    %v1514 = vadd.f32 %v1508, %v1513
    %v1515 = vmax.f32 %v1514, 0.0
    %v1516 = vld [vmem:[#allocation7 + $0x228] sm:$0xff]
    %v1517 = vld [vmem:[#allocation7 + $0x230] sm:$0xff]
    %v1518 = vld [vmem:[#allocation7 + $0x238] sm:$0xff]
    %v1519 = vld [vmem:[#allocation7 + $0x240] sm:$0xff]
    %v1520 = vld [vmem:[#allocation7 + $0x248] sm:$0xff]
    %v1521 = vld [vmem:[#allocation7 + $0x250] sm:$0xff]
    %v1522 = vld [vmem:[#allocation7 + $0x258] sm:$0xff]
    %v1523 = vld [vmem:[#allocation7 + $0x260] sm:$0xff]
    %v1524 = vld [vmem:[#allocation7 + $0x268] sm:$0x1]
    %v1525 = vlaneseq
    %v1526 = vshrl.u32 %v1525, 7
    %v1527 = vsub.s32 0, %v1526
    %v1528 = vrot.slane %v1524, %v1527
    %v1530 = vsel %vm179, %v1515, 0
    %1532 = vmatprep.subr.mxu0 0.0
    %1533 = vmatpush1.msra.mxu0 %v1516
    %1534 = vmatprep.subr.mxu0 0.0
    %1535 = vmatpush1.msra.mxu0 %v1517
    %1536 = vmatprep.subr.mxu0 0.0
    %1537 = vmatpush1.msra.mxu0 %v1518
    %1538 = vmatprep.subr.mxu0 0.0
    %1539 = vmatpush1.msra.mxu0 %v1519
    %1540 = vmatprep.subr.mxu0 0.0
    %1541 = vmatpush1.msra.mxu0 %v1520
    %1542 = vmatprep.subr.mxu0 0.0
    %1543 = vmatpush1.msra.mxu0 %v1521
    %1544 = vmatprep.subr.mxu0 0.0
    %1545 = vmatpush1.msra.mxu0 %v1522
    %1546 = vmatprep.subr.mxu0 0.0
    %1547 = vmatpush1.msra.mxu0 %v1523
    %1548 = vmatprep.subr.mxu0 0.0
    %1549 = vmatpush1.msra.mxu0 0.0
    %1550 = vmatprep.subr.mxu0 0.0
    %1551 = vmatpush1.msra.mxu0 0.0
    %1552 = vmatprep.subr.mxu0 0.0
    %1553 = vmatpush1.msra.mxu0 0.0
    %1554 = vmatprep.subr.mxu0 0.0
    %1555 = vmatpush1.msra.mxu0 0.0
    %1556 = vmatprep.subr.mxu0 0.0
    %1557 = vmatpush1.msra.mxu0 0.0
    %1558 = vmatprep.subr.mxu0 0.0
    %1559 = vmatpush1.msra.mxu0 0.0
    %1560 = vmatprep.subr.mxu0 0.0
    %1561 = vmatpush1.msra.mxu0 0.0
    %1562 = vmatprep.subr.mxu0 0.0
    %1563 = vmatpush1.msra.mxu0 0.0
    %1564 = vmatprep.subr.mxu0 0.0
    %1565 = vmatpush1.msra.mxu0 0.0
    %1566 = vmatprep.subr.mxu0 0.0
    %1567 = vmatpush1.msra.mxu0 0.0
    %1568 = vmatprep.subr.mxu0 0.0
    %1569 = vmatpush1.msra.mxu0 0.0
    %1570 = vmatprep.subr.mxu0 0.0
    %1571 = vmatpush1.msra.mxu0 0.0
    %1572 = vmatprep.subr.mxu0 0.0
    %1573 = vmatpush1.msra.mxu0 0.0
    %1574 = vmatprep.subr.mxu0 0.0
    %1575 = vmatpush1.msra.mxu0 0.0
    %1576 = vmatprep.subr.mxu0 0.0
    %1577 = vmatpush1.msra.mxu0 0.0
    %1578 = vmatprep.subr.mxu0 0.0
    %1579 = vmatpush1.msra.mxu0 0.0
    %1580 = vmatprep.subr.mxu0 0.0
    %1581 = vmatpush1.msra.mxu0 0.0
    %1582 = vmatprep.subr.mxu0 0.0
    %1583 = vmatpush1.msra.mxu0 0.0
    %1584 = vmatprep.subr.mxu0 0.0
    %1585 = vmatpush1.msra.mxu0 0.0
    %1586 = vmatprep.subr.mxu0 0.0
    %1587 = vmatpush1.msra.mxu0 0.0
    %1588 = vmatprep.subr.mxu0 0.0
    %1589 = vmatpush1.msra.mxu0 0.0
    %1590 = vmatprep.subr.mxu0 0.0
    %1591 = vmatpush1.msra.mxu0 0.0
    %1592 = vmatprep.subr.mxu0 0.0
    %1593 = vmatpush1.msra.mxu0 0.0
    %1594 = vmatprep.subr.mxu0 0.0
    %1595 = vmatpush1.msra.mxu0 0.0
    %1596 = vmatprep.mubr.f32.mxu0 0.0
    %1597 = vmatmul.mubr.f32.gmra.mrb[0].mxu0 %v1530
    %v1598 = vpop.f32.mrb[0].mxu0
    %v1599 = vadd.f32 %v1528, %v1598
    %v1600 = vpop.f32.mrb[0].mxu0
    %1601 = vdwg.mxu0
    %v1602 = vmax.f32 %v1599, 0.0
    %v1603 = vld [vmem:[#allocation7 + $0x270] sm:$0xff]
    %v1604 = vld [vmem:[#allocation7 + $0x278] sm:$0xff]
    %v1605 = vld [vmem:[#allocation7 + $0x280] sm:$0xff]
    %v1606 = vld [vmem:[#allocation7 + $0x288] sm:$0xff]
    %v1607 = vld [vmem:[#allocation7 + $0x290] sm:$0xf]
    %v1608 = vld [vmem:[#allocation7 + $0x298] sm:$0x1]
    %v1609 = vlaneseq
    %v1610 = vshrl.u32 %v1609, 7
    %v1611 = vsub.s32 0, %v1610
    %v1612 = vrot.slane %v1608, %v1611
    %vm1613 = vcmask 293888
    %v1615 = vsel %vm1613, %v1602, 0
    %v1618 = vsel %vm1344, %v1607, 0
    %1620 = vmatprep.subr.mxu0 0.0
    %1621 = vmatpush1.msra.mxu0 %v1603
    %1622 = vmatprep.subr.mxu0 0.0
    %1623 = vmatpush1.msra.mxu0 %v1604
    %1624 = vmatprep.subr.mxu0 0.0
    %1625 = vmatpush1.msra.mxu0 %v1605
    %1626 = vmatprep.subr.mxu0 0.0
    %1627 = vmatpush1.msra.mxu0 %v1606
    %1628 = vmatprep.subr.mxu0 0.0
    %1629 = vmatpush1.msra.mxu0 %v1618
    %1630 = vmatprep.subr.mxu0 0.0
    %1631 = vmatpush1.msra.mxu0 0.0
    %1632 = vmatprep.subr.mxu0 0.0
    %1633 = vmatpush1.msra.mxu0 0.0
    %1634 = vmatprep.subr.mxu0 0.0
    %1635 = vmatpush1.msra.mxu0 0.0
    %1636 = vmatprep.subr.mxu0 0.0
    %1637 = vmatpush1.msra.mxu0 0.0
    %1638 = vmatprep.subr.mxu0 0.0
    %1639 = vmatpush1.msra.mxu0 0.0
    %1640 = vmatprep.subr.mxu0 0.0
    %1641 = vmatpush1.msra.mxu0 0.0
    %1642 = vmatprep.subr.mxu0 0.0
    %1643 = vmatpush1.msra.mxu0 0.0
    %1644 = vmatprep.subr.mxu0 0.0
    %1645 = vmatpush1.msra.mxu0 0.0
    %1646 = vmatprep.subr.mxu0 0.0
    %1647 = vmatpush1.msra.mxu0 0.0
    %1648 = vmatprep.subr.mxu0 0.0
    %1649 = vmatpush1.msra.mxu0 0.0
    %1650 = vmatprep.subr.mxu0 0.0
    %1651 = vmatpush1.msra.mxu0 0.0
    %1652 = vmatprep.subr.mxu0 0.0
    %1653 = vmatpush1.msra.mxu0 0.0
    %1654 = vmatprep.subr.mxu0 0.0
    %1655 = vmatpush1.msra.mxu0 0.0
    %1656 = vmatprep.subr.mxu0 0.0
    %1657 = vmatpush1.msra.mxu0 0.0
    %1658 = vmatprep.subr.mxu0 0.0
    %1659 = vmatpush1.msra.mxu0 0.0
    %1660 = vmatprep.subr.mxu0 0.0
    %1661 = vmatpush1.msra.mxu0 0.0
    %1662 = vmatprep.subr.mxu0 0.0
    %1663 = vmatpush1.msra.mxu0 0.0
    %1664 = vmatprep.subr.mxu0 0.0
    %1665 = vmatpush1.msra.mxu0 0.0
    %1666 = vmatprep.subr.mxu0 0.0
    %1667 = vmatpush1.msra.mxu0 0.0
    %1668 = vmatprep.subr.mxu0 0.0
    %1669 = vmatpush1.msra.mxu0 0.0
    %1670 = vmatprep.subr.mxu0 0.0
    %1671 = vmatpush1.msra.mxu0 0.0
    %1672 = vmatprep.subr.mxu0 0.0
    %1673 = vmatpush1.msra.mxu0 0.0
    %1674 = vmatprep.subr.mxu0 0.0
    %1675 = vmatpush1.msra.mxu0 0.0
    %1676 = vmatprep.subr.mxu0 0.0
    %1677 = vmatpush1.msra.mxu0 0.0
    %1678 = vmatprep.subr.mxu0 0.0
    %1679 = vmatpush1.msra.mxu0 0.0
    %1680 = vmatprep.subr.mxu0 0.0
    %1681 = vmatpush1.msra.mxu0 0.0
    %1682 = vmatprep.subr.mxu0 0.0
    %1683 = vmatpush1.msra.mxu0 0.0
    %1684 = vmatprep.mubr.f32.mxu0 0.0
    %1685 = vmatmul.mubr.f32.gmra.mrb[0].mxu0 %v1615
    %v1686 = vpop.f32.mrb[0].mxu0
    %v1687 = vadd.f32 %v1612, %v1686
    %v1688 = vpop.f32.mrb[0].mxu0
    %1689 = vdwg.mxu0
    %v1690 = vlaneseq
    %v1691 = vand.u32 %v1690, 127
    %vm1692 = vcmp.eq.s32.totalorder %v1691, 0
    %v1693 = vsub.f32 0.0, %v1687
    %v1694 = vmul.f32 %v1693, 1.442695
    %v1695 = vpow.pop %v1694
    %v1696 = vadd.f32 %v1695, 1.0
    %v1697 = vrcp.pop %v1696
    %v1698 = vmul.f32 1.0, %v1697
    %v1699 = vsel %vm1692, %v1698, %v1687
    %vm1700 = vcmask 17408
    %1701 = vst.msk [vmem:[%s4] sm:$0x3] %vm1700, %v1699
    // Predicated region
    $region34: #{gin_att_net_forward.1} parent=1 // pred_check
      _
    $region35: #{gin_att_net_forward.1} parent=1 // pred_check_branch
      %1703 = sbr.rel (0) target = $region37
    $region36: #{gin_att_net_forward.1} parent=1 // pred_region
      _
    $region37: #{gin_att_net_forward.1} parent=1 // pred_fallthru
      _
    // Predicated region
    $region38: #{gin_att_net_forward.1} parent=1 // pred_check
      _
    $region39: #{gin_att_net_forward.1} parent=1 // pred_check_branch
      %1705 = sbr.rel (0) target = $region41
    $region40: #{gin_att_net_forward.1} parent=1 // pred_region
      _
    $region41: #{gin_att_net_forward.1} parent=1 // pred_fallthru
      _
    %1706 = vsyncpa [#allocation3], 1
    %1707 = vsyncpa [#allocation5], 1
    %1708 = vsyncpa [#allocation8], 1

</llo_original>
